<compile_context>
chip_gen: v7x
topology: tpu7x:2x2x1
jax: 0.10.0
libtpu: 0.0.40
codegen_flags: <defaults>
</compile_context>

<pallas_src>
import functools

import jax
import jax.numpy as jnp
import numpy as np
from jax.experimental import pallas as pl
from jax.experimental.pallas import tpu as pltpu

EPS = 1e-5


def _resblock_kernel(x_ref, w1_ref, w2_ref, q_ref,
                     g1_ref, b1_ref, g2_ref, b2_ref, out_ref,
                     *, img_h, inv_count):
    # x_ref    : (R, WC) = (N*H, W*C) lane-dense input
    # w1/w2    : (3, WC, WC) block-banded conv weights, one band per kernel row ky
    # q_ref    : (WC, WC) constant channel-pooling matrix (Q[i,j] = 1 iff i%C == j%C)
    # g*/b*    : (1, WC)  BN affine params pre-tiled to lane-dense width
    # out_ref  : (R, WC)
    x = x_ref[...]
    q = q_ref[...]
    rows = x.shape[0]

    # Image-boundary masks for the dy=+-1 row shifts (also stop bleeding across
    # batch images and across the roll wrap-around).  Computed once, reused by
    # both conv layers.
    yin = jax.lax.broadcasted_iota(jnp.int32, (rows, 1), 0) % img_h
    mask_up = (yin != 0).astype(jnp.float32)            # row y-1 exists
    mask_dn = (yin != img_h - 1).astype(jnp.float32)    # row y+1 exists

    def conv_bn(y, band_ref, g_ref, b_ref):
        # dy shifts: sublane rotations on the XLU + one VPU mask-multiply each
        # (no MXU work, no relayouts).  dx shifts / x-padding live inside the
        # banded weight matrices.
        y_up = pltpu.roll(y, shift=1, axis=0) * mask_up            # value from row y-1
        y_dn = pltpu.roll(y, shift=rows - 1, axis=0) * mask_dn     # value from row y+1
        z = jnp.dot(y_up, band_ref[0], preferred_element_type=jnp.float32)
        z = z + jnp.dot(y, band_ref[1], preferred_element_type=jnp.float32)
        z = z + jnp.dot(y_dn, band_ref[2], preferred_element_type=jnp.float32)

        # Training-mode BatchNorm2d: row-reduce first, then pool the W lane
        # groups per channel with tiny (1,WC)@(WC,WC) matmuls -> stats come out
        # already replicated lane-dense.  Folded into one FMA per element.
        rsum = jnp.sum(z, axis=0, keepdims=True)                    # (1, WC)
        rsq = jnp.sum(z * z, axis=0, keepdims=True)                 # (1, WC)
        mean = jnp.dot(rsum, q, preferred_element_type=jnp.float32) * inv_count
        ex2 = jnp.dot(rsq, q, preferred_element_type=jnp.float32) * inv_count
        var = ex2 - mean * mean                                     # biased batch var
        scale = g_ref[...] * jax.lax.rsqrt(var + EPS)               # (1, WC)
        shift = b_ref[...] - mean * scale                           # (1, WC)
        return z * scale + shift

    y1 = jnp.maximum(conv_bn(x, w1_ref, g1_ref, b1_ref), 0.0)
    y2 = conv_bn(y1, w2_ref, g2_ref, b2_ref)
    out_ref[...] = jnp.maximum(y2 + x, 0.0).astype(out_ref.dtype)


def _band_weights(w_oihw, width, chnl):
    """PyTorch (C_out, C_in, 3, 3) conv weight -> (3, W*C, W*C) block-banded mats.

    mats[ky][xin*C + ci, xout*C + co] = w[co, ci, ky, kx] with xin = xout + kx - 1;
    out-of-range xin has no entry, which reproduces the zero padding along x.
    """
    mats = []
    for ky in range(3):
        m = jnp.zeros((width * chnl, width * chnl), jnp.float32)
        for kx in range(3):
            blk = jnp.transpose(w_oihw[:, :, ky, kx]).astype(jnp.float32)  # (C_in, C_out)
            band = jnp.eye(width, k=1 - kx, dtype=jnp.float32)             # xin = xout+kx-1
            m = m + jnp.kron(band, blk)
        mats.append(m)
    return jnp.stack(mats)


def residual_block_forward(x_nchw, w1, w2, g1, b1, g2, b2):
    """Pallas ResidualBlock forward. x_nchw: (N, C, H, W); w*: (C, C, 3, 3)."""
    n, c, h, w = x_nchw.shape
    rows, wc = n * h, w * c

    # NCHW -> lane-dense (N*H, W*C): channels fastest within each lane group.
    x2d = jnp.transpose(x_nchw, (0, 2, 3, 1)).reshape(rows, wc).astype(jnp.float32)

    wb1 = _band_weights(w1, w, c)
    wb2 = _band_weights(w2, w, c)
    q = jnp.kron(jnp.ones((w, w), jnp.float32), jnp.eye(c, dtype=jnp.float32))  # (WC, WC)
    tile = lambda p: jnp.tile(p.reshape(1, c).astype(jnp.float32), (1, w))      # (1, WC)

    # Everything is VMEM-resident in one invocation (fits easily at this size);
    # size the scoped VMEM limit from the actual footprint, with headroom.
    footprint = 4 * (2 * rows * wc + 7 * wc * wc + 4 * wc)
    vmem_limit = int(min(max(6 * footprint, 8 * 1024 * 1024), 64 * 1024 * 1024))
    flops = 2 * (6 * rows * wc * wc + 4 * wc * wc) + 24 * rows * wc
    cost = pl.CostEstimate(flops=int(flops), transcendentals=2 * wc,
                           bytes_accessed=int(footprint))

    vmem_spec = pl.BlockSpec(memory_space=pltpu.MemorySpace.VMEM)
    out2d = pl.pallas_call(
        functools.partial(_resblock_kernel, img_h=h,
                          inv_count=1.0 / float(n * h * w)),
        out_shape=jax.ShapeDtypeStruct((rows, wc), jnp.float32),
        in_specs=[vmem_spec] * 8,
        out_specs=vmem_spec,
        compiler_params=pltpu.CompilerParams(vmem_limit_bytes=vmem_limit),
        cost_estimate=cost,
    )(x2d, wb1, wb2, q, tile(g1), tile(b1), tile(g2), tile(b2))

    return jnp.transpose(out2d.reshape(n, h, w, c), (0, 3, 1, 2))


def _reference(x_nchw, w1, w2, g1, b1, g2, b2):
    """Pure-JAX (XLA) reference mirroring the PyTorch module in training mode."""
    def conv(x, w):
        return jax.lax.conv_general_dilated(
            x, w, window_strides=(1, 1), padding="SAME",
            dimension_numbers=("NCHW", "OIHW", "NCHW"))

    def bn(y, g, b):
        mean = jnp.mean(y, axis=(0, 2, 3), keepdims=True)
        var = jnp.mean((y - mean) ** 2, axis=(0, 2, 3), keepdims=True)
        y = (y - mean) * jax.lax.rsqrt(var + EPS)
        return y * g.reshape(1, -1, 1, 1) + b.reshape(1, -1, 1, 1)

    y = jnp.maximum(bn(conv(x_nchw, w1), g1, b1), 0.0)
    y = bn(conv(y, w2), g2, b2) + x_nchw
    return jnp.maximum(y, 0.0)


if __name__ == "__main__":
    key = jax.random.PRNGKey(0)
    kx, k1, k2, kg1, kb1, kg2, kb2 = jax.random.split(key, 7)

    N, C, H, W = 2, 8, 16, 16          # W*C = 128 -> fully lane-dense layout
    x = jax.random.normal(kx, (N, C, H, W), jnp.float32)

    fan_in = C * 3 * 3
    w1 = jax.random.normal(k1, (C, C, 3, 3), jnp.float32) / np.sqrt(fan_in)
    w2 = jax.random.normal(k2, (C, C, 3, 3), jnp.float32) / np.sqrt(fan_in)
    g1 = 1.0 + 0.1 * jax.random.normal(kg1, (C,), jnp.float32)
    b1 = 0.1 * jax.random.normal(kb1, (C,), jnp.float32)
    g2 = 1.0 + 0.1 * jax.random.normal(kg2, (C,), jnp.float32)
    b2 = 0.1 * jax.random.normal(kb2, (C,), jnp.float32)

    out = residual_block_forward(x, w1, w2, g1, b1, g2, b2)
    out = jax.block_until_ready(out)

    ref = _reference(x, w1, w2, g1, b1, g2, b2)
    np.testing.assert_allclose(np.asarray(out), np.asarray(ref), rtol=2e-3, atol=2e-3)
    print("KERNEL_OK")
</pallas_src>

<mosaic_0001>
module attributes {stable_mosaic.version = 11 : i64} {
  func.func @_resblock_kernel(%arg0: memref<32x128xf32, #tpu.memory_space<vmem>>, %arg1: memref<3x128x128xf32, #tpu.memory_space<vmem>>, %arg2: memref<3x128x128xf32, #tpu.memory_space<vmem>>, %arg3: memref<128x128xf32, #tpu.memory_space<vmem>>, %arg4: memref<1x128xf32, #tpu.memory_space<vmem>>, %arg5: memref<1x128xf32, #tpu.memory_space<vmem>>, %arg6: memref<1x128xf32, #tpu.memory_space<vmem>>, %arg7: memref<1x128xf32, #tpu.memory_space<vmem>>, %arg8: memref<32x128xf32, #tpu.memory_space<vmem>>) attributes {dimension_semantics = [], scalar_prefetch = 0 : i64, scratch_operands = 0 : i64, tpu.core_type = #tpu.core_type<tc>} {
    %c0 = arith.constant 0 : index
    %c0_0 = arith.constant 0 : index
    %0 = vector.load %arg0[%c0, %c0_0] : memref<32x128xf32, #tpu.memory_space<vmem>>, vector<32x128xf32>
    %c0_1 = arith.constant 0 : index
    %c0_2 = arith.constant 0 : index
    %1 = vector.load %arg3[%c0_1, %c0_2] : memref<128x128xf32, #tpu.memory_space<vmem>>, vector<128x128xf32>
    %2 = tpu.iota {dimensions = array<i32: 0>} : vector<32x1xi32>
    %c16_i32 = arith.constant 16 : i32
    %c0_i32 = arith.constant 0 : i32
    %3 = arith.cmpi eq, %c16_i32, %c0_i32 : i32
    %c1_i32 = arith.constant 1 : i32
    %4 = arith.select %3, %c1_i32, %c16_i32 : i32
    %5 = vector.broadcast %4 : i32 to vector<32x1xi32>
    %6 = arith.remsi %2, %5 : vector<32x1xi32>
    %c0_i32_3 = arith.constant 0 : i32
    %7 = vector.broadcast %c0_i32_3 : i32 to vector<32x1xi32>
    %8 = arith.cmpi ne, %6, %7 : vector<32x1xi32>
    %c0_i32_4 = arith.constant 0 : i32
    %9 = vector.broadcast %c0_i32_4 : i32 to vector<32x1xi32>
    %10 = arith.cmpi slt, %6, %9 : vector<32x1xi32>
    %c0_i32_5 = arith.constant 0 : i32
    %11 = arith.cmpi slt, %4, %c0_i32_5 : i32
    %12 = vector.broadcast %11 : i1 to vector<32x1xi1>
    %13 = vector.broadcast %12 : vector<32x1xi1> to vector<32x1xi1>
    %14 = arith.xori %10, %13 : vector<32x1xi1>
    %15 = arith.andi %14, %8 : vector<32x1xi1>
    %16 = vector.broadcast %4 : i32 to vector<32x1xi32>
    %17 = arith.addi %6, %16 : vector<32x1xi32>
    %18 = arith.select %15, %17, %6 : vector<32x1xi1>, vector<32x1xi32>
    %c0_i32_6 = arith.constant 0 : i32
    %19 = vector.broadcast %c0_i32_6 : i32 to vector<32x1xi32>
    %20 = arith.cmpi ne, %18, %19 : vector<32x1xi32>
    %21 = arith.extui %20 : vector<32x1xi1> to vector<32x1xi32>
    %22 = arith.sitofp %21 : vector<32x1xi32> to vector<32x1xf32>
    %c15_i32 = arith.constant 15 : i32
    %23 = vector.broadcast %c15_i32 : i32 to vector<32x1xi32>
    %24 = arith.cmpi ne, %18, %23 : vector<32x1xi32>
    %25 = arith.extui %24 : vector<32x1xi1> to vector<32x1xi32>
    %26 = arith.sitofp %25 : vector<32x1xi32> to vector<32x1xf32>
    %c1_i32_7 = arith.constant 1 : i32
    %27 = tpu.dynamic_rotate %0 by %c1_i32_7 dim 0 : vector<32x128xf32>, i32 -> vector<32x128xf32>
    %28 = vector.broadcast %22 : vector<32x1xf32> to vector<32x128xf32>
    %29 = arith.mulf %27, %28 : vector<32x128xf32>
    %c31_i32 = arith.constant 31 : i32
    %30 = tpu.dynamic_rotate %0 by %c31_i32 dim 0 : vector<32x128xf32>, i32 -> vector<32x128xf32>
    %31 = vector.broadcast %26 : vector<32x1xf32> to vector<32x128xf32>
    %32 = arith.mulf %30, %31 : vector<32x128xf32>
    %c0_8 = arith.constant 0 : index
    %c0_9 = arith.constant 0 : index
    %c0_10 = arith.constant 0 : index
    %33 = vector.load %arg1[%c0_8, %c0_9, %c0_10] : memref<3x128x128xf32, #tpu.memory_space<vmem>>, vector<1x128x128xf32>
    %34 = vector.shape_cast %33 : vector<1x128x128xf32> to vector<128x128xf32>
    %cst = arith.constant dense<0.000000e+00> : vector<32x128xf32>
    %35 = tpu.matmul %29, %34, %cst {dimension_numbers = #tpu.dot_dimension_numbers<[1], [0], [0], [1], [0, 0, 1, 1], [], []>} : vector<32x128xf32>, vector<128x128xf32>, vector<32x128xf32> -> vector<32x128xf32>
    %c1 = arith.constant 1 : index
    %c0_11 = arith.constant 0 : index
    %c0_12 = arith.constant 0 : index
    %36 = vector.load %arg1[%c1, %c0_11, %c0_12] : memref<3x128x128xf32, #tpu.memory_space<vmem>>, vector<1x128x128xf32>
    %37 = vector.shape_cast %36 : vector<1x128x128xf32> to vector<128x128xf32>
    %cst_13 = arith.constant dense<0.000000e+00> : vector<32x128xf32>
    %38 = tpu.matmul %0, %37, %cst_13 {dimension_numbers = #tpu.dot_dimension_numbers<[1], [0], [0], [1], [0, 0, 1, 1], [], []>} : vector<32x128xf32>, vector<128x128xf32>, vector<32x128xf32> -> vector<32x128xf32>
    %39 = arith.addf %35, %38 : vector<32x128xf32>
    %c2 = arith.constant 2 : index
    %c0_14 = arith.constant 0 : index
    %c0_15 = arith.constant 0 : index
    %40 = vector.load %arg1[%c2, %c0_14, %c0_15] : memref<3x128x128xf32, #tpu.memory_space<vmem>>, vector<1x128x128xf32>
    %41 = vector.shape_cast %40 : vector<1x128x128xf32> to vector<128x128xf32>
    %cst_16 = arith.constant dense<0.000000e+00> : vector<32x128xf32>
    %42 = tpu.matmul %32, %41, %cst_16 {dimension_numbers = #tpu.dot_dimension_numbers<[1], [0], [0], [1], [0, 0, 1, 1], [], []>} : vector<32x128xf32>, vector<128x128xf32>, vector<32x128xf32> -> vector<32x128xf32>
    %43 = arith.addf %39, %42 : vector<32x128xf32>
    %cst_17 = arith.constant dense<0.000000e+00> : vector<128xf32>
    %44 = vector.multi_reduction <add>, %43, %cst_17 [0] : vector<32x128xf32> to vector<128xf32>
    %45 = vector.shape_cast %44 : vector<128xf32> to vector<1x128xf32>
    %46 = arith.mulf %43, %43 : vector<32x128xf32>
    %cst_18 = arith.constant dense<0.000000e+00> : vector<128xf32>
    %47 = vector.multi_reduction <add>, %46, %cst_18 [0] : vector<32x128xf32> to vector<128xf32>
    %48 = vector.shape_cast %47 : vector<128xf32> to vector<1x128xf32>
    %cst_19 = arith.constant dense<0.000000e+00> : vector<1x128xf32>
    %49 = tpu.matmul %45, %1, %cst_19 {dimension_numbers = #tpu.dot_dimension_numbers<[1], [0], [0], [1], [0, 0, 1, 1], [], []>} : vector<1x128xf32>, vector<128x128xf32>, vector<1x128xf32> -> vector<1x128xf32>
    %cst_20 = arith.constant 0.001953125 : f32
    %50 = vector.broadcast %cst_20 : f32 to vector<1x128xf32>
    %51 = arith.mulf %49, %50 : vector<1x128xf32>
    %cst_21 = arith.constant dense<0.000000e+00> : vector<1x128xf32>
    %52 = tpu.matmul %48, %1, %cst_21 {dimension_numbers = #tpu.dot_dimension_numbers<[1], [0], [0], [1], [0, 0, 1, 1], [], []>} : vector<1x128xf32>, vector<128x128xf32>, vector<1x128xf32> -> vector<1x128xf32>
    %cst_22 = arith.constant 0.001953125 : f32
    %53 = vector.broadcast %cst_22 : f32 to vector<1x128xf32>
    %54 = arith.mulf %52, %53 : vector<1x128xf32>
    %55 = arith.mulf %51, %51 : vector<1x128xf32>
    %56 = arith.subf %54, %55 : vector<1x128xf32>
    %c0_23 = arith.constant 0 : index
    %c0_24 = arith.constant 0 : index
    %57 = vector.load %arg4[%c0_23, %c0_24] : memref<1x128xf32, #tpu.memory_space<vmem>>, vector<1x128xf32>
    %cst_25 = arith.constant 9.99999974E-6 : f32
    %58 = vector.broadcast %cst_25 : f32 to vector<1x128xf32>
    %59 = arith.addf %56, %58 : vector<1x128xf32>
    %60 = math.rsqrt %59 : vector<1x128xf32>
    %61 = arith.mulf %57, %60 : vector<1x128xf32>
    %c0_26 = arith.constant 0 : index
    %c0_27 = arith.constant 0 : index
    %62 = vector.load %arg5[%c0_26, %c0_27] : memref<1x128xf32, #tpu.memory_space<vmem>>, vector<1x128xf32>
    %63 = arith.mulf %51, %61 : vector<1x128xf32>
    %64 = arith.subf %62, %63 : vector<1x128xf32>
    %65 = vector.broadcast %61 : vector<1x128xf32> to vector<32x128xf32>
    %66 = arith.mulf %43, %65 : vector<32x128xf32>
    %67 = vector.broadcast %64 : vector<1x128xf32> to vector<32x128xf32>
    %68 = arith.addf %66, %67 : vector<32x128xf32>
    %cst_28 = arith.constant 0.000000e+00 : f32
    %69 = vector.broadcast %cst_28 : f32 to vector<32x128xf32>
    %70 = arith.maximumf %68, %69 : vector<32x128xf32>
    %c1_i32_29 = arith.constant 1 : i32
    %71 = tpu.dynamic_rotate %70 by %c1_i32_29 dim 0 : vector<32x128xf32>, i32 -> vector<32x128xf32>
    %72 = vector.broadcast %22 : vector<32x1xf32> to vector<32x128xf32>
    %73 = arith.mulf %71, %72 : vector<32x128xf32>
    %c31_i32_30 = arith.constant 31 : i32
    %74 = tpu.dynamic_rotate %70 by %c31_i32_30 dim 0 : vector<32x128xf32>, i32 -> vector<32x128xf32>
    %75 = vector.broadcast %26 : vector<32x1xf32> to vector<32x128xf32>
    %76 = arith.mulf %74, %75 : vector<32x128xf32>
    %c0_31 = arith.constant 0 : index
    %c0_32 = arith.constant 0 : index
    %c0_33 = arith.constant 0 : index
    %77 = vector.load %arg2[%c0_31, %c0_32, %c0_33] : memref<3x128x128xf32, #tpu.memory_space<vmem>>, vector<1x128x128xf32>
    %78 = vector.shape_cast %77 : vector<1x128x128xf32> to vector<128x128xf32>
    %cst_34 = arith.constant dense<0.000000e+00> : vector<32x128xf32>
    %79 = tpu.matmul %73, %78, %cst_34 {dimension_numbers = #tpu.dot_dimension_numbers<[1], [0], [0], [1], [0, 0, 1, 1], [], []>} : vector<32x128xf32>, vector<128x128xf32>, vector<32x128xf32> -> vector<32x128xf32>
    %c1_35 = arith.constant 1 : index
    %c0_36 = arith.constant 0 : index
    %c0_37 = arith.constant 0 : index
    %80 = vector.load %arg2[%c1_35, %c0_36, %c0_37] : memref<3x128x128xf32, #tpu.memory_space<vmem>>, vector<1x128x128xf32>
    %81 = vector.shape_cast %80 : vector<1x128x128xf32> to vector<128x128xf32>
    %cst_38 = arith.constant dense<0.000000e+00> : vector<32x128xf32>
    %82 = tpu.matmul %70, %81, %cst_38 {dimension_numbers = #tpu.dot_dimension_numbers<[1], [0], [0], [1], [0, 0, 1, 1], [], []>} : vector<32x128xf32>, vector<128x128xf32>, vector<32x128xf32> -> vector<32x128xf32>
    %83 = arith.addf %79, %82 : vector<32x128xf32>
    %c2_39 = arith.constant 2 : index
    %c0_40 = arith.constant 0 : index
    %c0_41 = arith.constant 0 : index
    %84 = vector.load %arg2[%c2_39, %c0_40, %c0_41] : memref<3x128x128xf32, #tpu.memory_space<vmem>>, vector<1x128x128xf32>
    %85 = vector.shape_cast %84 : vector<1x128x128xf32> to vector<128x128xf32>
    %cst_42 = arith.constant dense<0.000000e+00> : vector<32x128xf32>
    %86 = tpu.matmul %76, %85, %cst_42 {dimension_numbers = #tpu.dot_dimension_numbers<[1], [0], [0], [1], [0, 0, 1, 1], [], []>} : vector<32x128xf32>, vector<128x128xf32>, vector<32x128xf32> -> vector<32x128xf32>
    %87 = arith.addf %83, %86 : vector<32x128xf32>
    %cst_43 = arith.constant dense<0.000000e+00> : vector<128xf32>
    %88 = vector.multi_reduction <add>, %87, %cst_43 [0] : vector<32x128xf32> to vector<128xf32>
    %89 = vector.shape_cast %88 : vector<128xf32> to vector<1x128xf32>
    %90 = arith.mulf %87, %87 : vector<32x128xf32>
    %cst_44 = arith.constant dense<0.000000e+00> : vector<128xf32>
    %91 = vector.multi_reduction <add>, %90, %cst_44 [0] : vector<32x128xf32> to vector<128xf32>
    %92 = vector.shape_cast %91 : vector<128xf32> to vector<1x128xf32>
    %cst_45 = arith.constant dense<0.000000e+00> : vector<1x128xf32>
    %93 = tpu.matmul %89, %1, %cst_45 {dimension_numbers = #tpu.dot_dimension_numbers<[1], [0], [0], [1], [0, 0, 1, 1], [], []>} : vector<1x128xf32>, vector<128x128xf32>, vector<1x128xf32> -> vector<1x128xf32>
    %cst_46 = arith.constant 0.001953125 : f32
    %94 = vector.broadcast %cst_46 : f32 to vector<1x128xf32>
    %95 = arith.mulf %93, %94 : vector<1x128xf32>
    %cst_47 = arith.constant dense<0.000000e+00> : vector<1x128xf32>
    %96 = tpu.matmul %92, %1, %cst_47 {dimension_numbers = #tpu.dot_dimension_numbers<[1], [0], [0], [1], [0, 0, 1, 1], [], []>} : vector<1x128xf32>, vector<128x128xf32>, vector<1x128xf32> -> vector<1x128xf32>
    %cst_48 = arith.constant 0.001953125 : f32
    %97 = vector.broadcast %cst_48 : f32 to vector<1x128xf32>
    %98 = arith.mulf %96, %97 : vector<1x128xf32>
    %99 = arith.mulf %95, %95 : vector<1x128xf32>
    %100 = arith.subf %98, %99 : vector<1x128xf32>
    %c0_49 = arith.constant 0 : index
    %c0_50 = arith.constant 0 : index
    %101 = vector.load %arg6[%c0_49, %c0_50] : memref<1x128xf32, #tpu.memory_space<vmem>>, vector<1x128xf32>
    %cst_51 = arith.constant 9.99999974E-6 : f32
    %102 = vector.broadcast %cst_51 : f32 to vector<1x128xf32>
    %103 = arith.addf %100, %102 : vector<1x128xf32>
    %104 = math.rsqrt %103 : vector<1x128xf32>
    %105 = arith.mulf %101, %104 : vector<1x128xf32>
    %c0_52 = arith.constant 0 : index
    %c0_53 = arith.constant 0 : index
    %106 = vector.load %arg7[%c0_52, %c0_53] : memref<1x128xf32, #tpu.memory_space<vmem>>, vector<1x128xf32>
    %107 = arith.mulf %95, %105 : vector<1x128xf32>
    %108 = arith.subf %106, %107 : vector<1x128xf32>
    %109 = vector.broadcast %105 : vector<1x128xf32> to vector<32x128xf32>
    %110 = arith.mulf %87, %109 : vector<32x128xf32>
    %111 = vector.broadcast %108 : vector<1x128xf32> to vector<32x128xf32>
    %112 = arith.addf %110, %111 : vector<32x128xf32>
    %113 = arith.addf %112, %0 : vector<32x128xf32>
    %cst_54 = arith.constant 0.000000e+00 : f32
    %114 = vector.broadcast %cst_54 : f32 to vector<32x128xf32>
    %115 = arith.maximumf %113, %114 : vector<32x128xf32>
    %c0_55 = arith.constant 0 : index
    %c0_56 = arith.constant 0 : index
    %116 = vector.load %arg8[%c0_55, %c0_56] : memref<32x128xf32, #tpu.memory_space<vmem>>, vector<32x128xf32>
    tpu.vector_store %arg8[%c0_55, %c0_56], %115 {strides = array<i32>} : memref<32x128xf32, #tpu.memory_space<vmem>>, vector<32x128xf32>,
    return
  }
}

</mosaic_0001>

<llo_original>
// kernel: tpu_custom_call.1
$region0: #{tpu_custom_call.1}
  #allocation0 [shape = 'u32[]', space=smem, size = 0x4, offset = 0x4, fixed_abs, tag = 'smem constant byte address 0x4 - core index']
  #allocation1 [shape = 'u32[144,128]{1,0:T(1,128)}', space=vmem, size = 0x12000, scoped, tag = 'internal scratch']
  %s0 = inlined_call_operand.hbm [shape: f32[32,128], index: 0, kind: input, shape index: {}]
  %s1 = inlined_call_operand.hbm [shape: f32[3,128,128], index: 1, kind: input, shape index: {}]
  %s2 = inlined_call_operand.hbm [shape: f32[3,128,128], index: 2, kind: input, shape index: {}]
  %s3 = inlined_call_operand.hbm [shape: f32[128,128], index: 3, kind: input, shape index: {}]
  %s4 = inlined_call_operand.vmem [shape: f32[1,128], index: 4, kind: input, shape index: {}]
  %s5 = inlined_call_operand.vmem [shape: f32[1,128], index: 5, kind: input, shape index: {}]
  %s6 = inlined_call_operand.vmem [shape: f32[1,128], index: 6, kind: input, shape index: {}]
  %s7 = inlined_call_operand.vmem [shape: f32[1,128], index: 7, kind: input, shape index: {}]
  %s8 = inlined_call_operand.hbm [shape: f32[32,128], index: 8, kind: output, shape index: {}]
  %s9 = sld [smem:[#allocation0]]
  $region58: #{tpu_custom_call.1} parent=0
    _
  %s11 = ssub.s32 1, %s9
  %s12 = scalar_select 0, %s11, %s9
  $region1: #{tpu_custom_call.1} parent=0
    #allocation2 [shape = 'u8[16384]{0}', space=vmem, size = 0x4000, scoped, tag = 'input window, operand 0, single buffered']
    #allocation3 [shape = 's32[1]{0}', space=sflag, size = 0x4, scoped, tag = 'scoped memory for tpu_custom_call.1']
    #allocation4 [shape = 's32[1]{0}', space=sflag, size = 0x4, scoped, tag = 'scoped memory for tpu_custom_call.1']
    #allocation5 [shape = 'u8[196608]{0}', space=vmem, size = 0x30000, scoped, tag = 'input window, operand 1, single buffered']
    #allocation6 [shape = 's32[1]{0}', space=sflag, size = 0x4, scoped, tag = 'scoped memory for tpu_custom_call.1']
    #allocation7 [shape = 'u8[196608]{0}', space=vmem, size = 0x30000, scoped, tag = 'input window, operand 2, single buffered']
    #allocation8 [shape = 'u8[65536]{0}', space=vmem, size = 0x10000, scoped, tag = 'input window, operand 3, single buffered']
    #allocation9 [shape = 's32[1]{0}', space=sflag, size = 0x4, scoped, tag = 'scoped memory for tpu_custom_call.1']
    #allocation10 [shape = 'u8[16384]{0}', space=vmem, size = 0x4000, scoped, tag = 'output window, operand 0, single buffered']
    %13 = vsyncpa [#allocation3], 0
    %14 = vsyncpa [#allocation6], 0
    %15 = vsyncpa [#allocation9], 0
    %16 = vsyncpa [#allocation4], 0
    // Predicated region
    $region2: #{tpu_custom_call.1} parent=1 // pred_check
      _
    $region3: #{tpu_custom_call.1} parent=1 // pred_check_branch
      %18 = sbr.rel (0) target = $region5
    $region4: #{tpu_custom_call.1} parent=1 // pred_region
      %s20 = ssub.s32 512, 512
      %21 = vsyncadd [#allocation3], %s20
      %s22 = sshll.u32 [#allocation2], 4
      %s23 = int_to_ptr.vmem [resolvable:$true] %s22
      %28 = dma.hbm_to_vmem [thread:$0]  %s0, 512, %s23, [#allocation3], 128, 128, 8
    $region5: #{tpu_custom_call.1} parent=1 // pred_fallthru
      _
    // Predicated region
    $region6: #{tpu_custom_call.1} parent=1 // pred_check
      _
    $region7: #{tpu_custom_call.1} parent=1 // pred_check_branch
      %30 = sbr.rel (0) target = $region9
    $region8: #{tpu_custom_call.1} parent=1 // pred_region
      %s32 = ssub.s32 6144, 6144
      %33 = vsyncadd [#allocation6], %s32
      %s34 = sshll.u32 [#allocation5], 4
      %s35 = int_to_ptr.vmem [resolvable:$true] %s34
      %40 = dma.hbm_to_vmem [thread:$0]  %s1, 6144, %s35, [#allocation6], 128, 128, 8
    $region9: #{tpu_custom_call.1} parent=1 // pred_fallthru
      _
    // Predicated region
    $region10: #{tpu_custom_call.1} parent=1 // pred_check
      _
    $region11: #{tpu_custom_call.1} parent=1 // pred_check_branch
      %42 = sbr.rel (0) target = $region13
    $region12: #{tpu_custom_call.1} parent=1 // pred_region
      %s44 = ssub.s32 6144, 6144
      %45 = vsyncadd [#allocation6], %s44
      %s46 = sshll.u32 [#allocation7], 4
      %s47 = int_to_ptr.vmem [resolvable:$true] %s46
      %52 = dma.hbm_to_vmem [thread:$0]  %s2, 6144, %s47, [#allocation6], 128, 128, 8
    $region13: #{tpu_custom_call.1} parent=1 // pred_fallthru
      _
    // Predicated region
    $region14: #{tpu_custom_call.1} parent=1 // pred_check
      _
    $region15: #{tpu_custom_call.1} parent=1 // pred_check_branch
      %54 = sbr.rel (0) target = $region17
    $region16: #{tpu_custom_call.1} parent=1 // pred_region
      %s56 = ssub.s32 2048, 2048
      %57 = vsyncadd [#allocation9], %s56
      %s58 = sshll.u32 [#allocation8], 4
      %s59 = int_to_ptr.vmem [resolvable:$true] %s58
      %64 = dma.hbm_to_vmem [thread:$0]  %s3, 2048, %s59, [#allocation9], 128, 128, 8
    $region17: #{tpu_custom_call.1} parent=1 // pred_fallthru
      _
    // Predicated region
    $region18: #{tpu_custom_call.1} parent=1 // pred_check
      _
    $region19: #{tpu_custom_call.1} parent=1 // pred_check_branch
      %66 = sbr.rel (0) target = $region21
    $region20: #{tpu_custom_call.1} parent=1 // pred_region
      _
    $region21: #{tpu_custom_call.1} parent=1 // pred_fallthru
      _
    // Predicated region
    $region22: #{tpu_custom_call.1} parent=1 // pred_check
      _
    $region23: #{tpu_custom_call.1} parent=1 // pred_check_branch
      %68 = sbr.rel (0) target = $region25
    $region24: #{tpu_custom_call.1} parent=1 // pred_region
      _
    $region25: #{tpu_custom_call.1} parent=1 // pred_fallthru
      _
    // Predicated region
    $region26: #{tpu_custom_call.1} parent=1 // pred_check
      _
    $region27: #{tpu_custom_call.1} parent=1 // pred_check_branch
      %70 = sbr.rel (0) target = $region29
    $region28: #{tpu_custom_call.1} parent=1 // pred_region
      _
    $region29: #{tpu_custom_call.1} parent=1 // pred_fallthru
      _
    // Predicated region
    $region30: #{tpu_custom_call.1} parent=1 // pred_check
      _
    $region31: #{tpu_custom_call.1} parent=1 // pred_check_branch
      %72 = sbr.rel (0) target = $region33
    $region32: #{tpu_custom_call.1} parent=1 // pred_region
      _
    $region33: #{tpu_custom_call.1} parent=1 // pred_fallthru
      _
    // Predicated region
    $region34: #{tpu_custom_call.1} parent=1 // pred_check
      _
    $region35: #{tpu_custom_call.1} parent=1 // pred_check_branch
      %74 = sbr.rel (0) target = $region37
    $region36: #{tpu_custom_call.1} parent=1 // pred_region
      %75 = dma.done [#allocation3], 512
    $region37: #{tpu_custom_call.1} parent=1 // pred_fallthru
      _
    // Predicated region
    $region38: #{tpu_custom_call.1} parent=1 // pred_check
      _
    $region39: #{tpu_custom_call.1} parent=1 // pred_check_branch
      %77 = sbr.rel (0) target = $region41
    $region40: #{tpu_custom_call.1} parent=1 // pred_region
      %78 = dma.done [#allocation6], 6144
    $region41: #{tpu_custom_call.1} parent=1 // pred_fallthru
      _
    // Predicated region
    $region42: #{tpu_custom_call.1} parent=1 // pred_check
      _
    $region43: #{tpu_custom_call.1} parent=1 // pred_check_branch
      %80 = sbr.rel (0) target = $region45
    $region44: #{tpu_custom_call.1} parent=1 // pred_region
      %81 = dma.done [#allocation6], 6144
    $region45: #{tpu_custom_call.1} parent=1 // pred_fallthru
      _
    // Predicated region
    $region46: #{tpu_custom_call.1} parent=1 // pred_check
      _
    $region47: #{tpu_custom_call.1} parent=1 // pred_check_branch
      %83 = sbr.rel (0) target = $region49
    $region48: #{tpu_custom_call.1} parent=1 // pred_region
      %84 = dma.done [#allocation9], 2048
    $region49: #{tpu_custom_call.1} parent=1 // pred_fallthru
      _
    %v85 = vld [vmem:[#allocation2] sm:$0xff]
    %v86 = vld [vmem:[#allocation2 + $0x8] sm:$0xff]
    %v87 = vld [vmem:[#allocation2 + $0x10] sm:$0xff]
    %v88 = vld [vmem:[#allocation2 + $0x18] sm:$0xff]
    %v89 = vld [vmem:[#allocation8] sm:$0xff]
    %v90 = vld [vmem:[#allocation8 + $0x8] sm:$0xff]
    %v91 = vld [vmem:[#allocation8 + $0x10] sm:$0xff]
    %v92 = vld [vmem:[#allocation8 + $0x18] sm:$0xff]
    %v93 = vld [vmem:[#allocation8 + $0x20] sm:$0xff]
    %v94 = vld [vmem:[#allocation8 + $0x28] sm:$0xff]
    %v95 = vld [vmem:[#allocation8 + $0x30] sm:$0xff]
    %v96 = vld [vmem:[#allocation8 + $0x38] sm:$0xff]
    %v97 = vld [vmem:[#allocation8 + $0x40] sm:$0xff]
    %v98 = vld [vmem:[#allocation8 + $0x48] sm:$0xff]
    %v99 = vld [vmem:[#allocation8 + $0x50] sm:$0xff]
    %v100 = vld [vmem:[#allocation8 + $0x58] sm:$0xff]
    %v101 = vld [vmem:[#allocation8 + $0x60] sm:$0xff]
    %v102 = vld [vmem:[#allocation8 + $0x68] sm:$0xff]
    %v103 = vld [vmem:[#allocation8 + $0x70] sm:$0xff]
    %v104 = vld [vmem:[#allocation8 + $0x78] sm:$0xff]
    %v105 = vlaneseq
    %v106 = vshrl.u32 %v105, 7
    %v107 = vadd.s32 %v106, 8
    %v108 = vadd.s32 %v106, 16
    %v109 = vadd.s32 %v106, 24
    %vm110 = vcmp.lt.s32.totalorder %v106, 0
    %v111 = vsub.s32 0, %v106
    %v112 = vsel %vm110, %v111, %v106
    %v113 = vshrl.u32 %v112, 4
    %v114 = vand.u32 %v112, 15
    %v115 = vsub.s32 0, %v114
    %v116 = vsel %vm110, %v115, %v114
    %vm117 = vcmp.lt.s32.totalorder %v107, 0
    %v118 = vsub.s32 0, %v107
    %v119 = vsel %vm117, %v118, %v107
    %v120 = vshrl.u32 %v119, 4
    %v121 = vand.u32 %v119, 15
    %v122 = vsub.s32 0, %v121
    %v123 = vsel %vm117, %v122, %v121
    %vm124 = vcmp.lt.s32.totalorder %v108, 0
    %v125 = vsub.s32 0, %v108
    %v126 = vsel %vm124, %v125, %v108
    %v127 = vshrl.u32 %v126, 4
    %v128 = vand.u32 %v126, 15
    %v129 = vsub.s32 0, %v128
    %v130 = vsel %vm124, %v129, %v128
    %vm131 = vcmp.lt.s32.totalorder %v109, 0
    %v132 = vsub.s32 0, %v109
    %v133 = vsel %vm131, %v132, %v109
    %v134 = vshrl.u32 %v133, 4
    %v135 = vand.u32 %v133, 15
    %v136 = vsub.s32 0, %v135
    %v137 = vsel %vm131, %v136, %v135
    %vm138 = vcmp.ne.s32.totalorder %v116, 0
    %vm139 = vcmp.ne.s32.totalorder %v123, 0
    %vm140 = vcmp.ne.s32.totalorder %v130, 0
    %vm141 = vcmp.ne.s32.totalorder %v137, 0
    %vm142 = vcmp.lt.s32.totalorder %v116, 0
    %vm143 = vcmp.lt.s32.totalorder %v123, 0
    %vm144 = vcmp.lt.s32.totalorder %v130, 0
    %vm145 = vcmp.lt.s32.totalorder %v137, 0
    %vm146 = vmand %vm142, %vm138
    %vm147 = vmand %vm143, %vm139
    %vm148 = vmand %vm144, %vm140
    %vm149 = vmand %vm145, %vm141
    %v150 = vadd.s32 %v116, 16
    %v151 = vadd.s32 %v123, 16
    %v152 = vadd.s32 %v130, 16
    %v153 = vadd.s32 %v137, 16
    %v154 = vsel %vm146, %v150, %v116
    %v155 = vsel %vm147, %v151, %v123
    %v156 = vsel %vm148, %v152, %v130
    %v157 = vsel %vm149, %v153, %v137
    %vm158 = vcmp.ne.s32.totalorder %v154, 0
    %vm159 = vcmp.ne.s32.totalorder %v155, 0
    %vm160 = vcmp.ne.s32.totalorder %v156, 0
    %vm161 = vcmp.ne.s32.totalorder %v157, 0
    %v162 = vsel %vm158, 1, 0
    %v163 = vsel %vm159, 1, 0
    %v164 = vsel %vm160, 1, 0
    %v165 = vsel %vm161, 1, 0
    %v166 = vcvt.s32.f32 %v162
    %v167 = vcvt.s32.f32 %v163
    %v168 = vcvt.s32.f32 %v164
    %v169 = vcvt.s32.f32 %v165
    %vm170 = vcmp.ne.s32.totalorder %v154, 15
    %vm171 = vcmp.ne.s32.totalorder %v155, 15
    %vm172 = vcmp.ne.s32.totalorder %v156, 15
    %vm173 = vcmp.ne.s32.totalorder %v157, 15
    %v174 = vsel %vm170, 1, 0
    %v175 = vsel %vm171, 1, 0
    %v176 = vsel %vm172, 1, 0
    %v177 = vsel %vm173, 1, 0
    %v178 = vcvt.s32.f32 %v174
    %v179 = vcvt.s32.f32 %v175
    %v180 = vcvt.s32.f32 %v176
    %v181 = vcvt.s32.f32 %v177
    %v182 = vrot.slane %v85, 7
    %v183 = vrot.slane %v86, 7
    %v184 = vrot.slane %v87, 7
    %v185 = vrot.slane %v88, 7
    %vm186 = vcmp.lt.s32.totalorder %v106, 1
    %v187 = vsel %vm186, %v184, %v185
    %v188 = vsel %vm186, %v183, %v184
    %v189 = vsel %vm186, %v182, %v183
    %v190 = vsel %vm186, %v185, %v182
    %v191 = vmul.f32 %v190, %v166
    %v192 = vmul.f32 %v189, %v167
    %v193 = vmul.f32 %v188, %v168
    %v194 = vmul.f32 %v187, %v169
    %v195 = vrot.slane %v85, 1
    %v196 = vrot.slane %v86, 1
    %v197 = vrot.slane %v87, 1
    %v198 = vrot.slane %v88, 1
    %vm199 = vcmp.lt.s32.totalorder %v106, 7
    %v200 = vsel %vm199, %v197, %v198
    %v201 = vsel %vm199, %v196, %v197
    %v202 = vsel %vm199, %v195, %v196
    %v203 = vsel %vm199, %v198, %v195
    %v204 = vmul.f32 %v202, %v178
    %v205 = vmul.f32 %v201, %v179
    %v206 = vmul.f32 %v200, %v180
    %v207 = vmul.f32 %v203, %v181
    %v208 = vld [vmem:[#allocation5] sm:$0xff]
    %v209 = vld [vmem:[#allocation5 + $0x8] sm:$0xff]
    %v210 = vld [vmem:[#allocation5 + $0x10] sm:$0xff]
    %v211 = vld [vmem:[#allocation5 + $0x18] sm:$0xff]
    %v212 = vld [vmem:[#allocation5 + $0x20] sm:$0xff]
    %v213 = vld [vmem:[#allocation5 + $0x28] sm:$0xff]
    %v214 = vld [vmem:[#allocation5 + $0x30] sm:$0xff]
    %v215 = vld [vmem:[#allocation5 + $0x38] sm:$0xff]
    %v216 = vld [vmem:[#allocation5 + $0x40] sm:$0xff]
    %v217 = vld [vmem:[#allocation5 + $0x48] sm:$0xff]
    %v218 = vld [vmem:[#allocation5 + $0x50] sm:$0xff]
    %v219 = vld [vmem:[#allocation5 + $0x58] sm:$0xff]
    %v220 = vld [vmem:[#allocation5 + $0x60] sm:$0xff]
    %v221 = vld [vmem:[#allocation5 + $0x68] sm:$0xff]
    %v222 = vld [vmem:[#allocation5 + $0x70] sm:$0xff]
    %v223 = vld [vmem:[#allocation5 + $0x78] sm:$0xff]
    %s224 = scalar_lea.vmem [#allocation5], 128
    %v225 = vld [vmem:[%s224] sm:$0xff]
    %v226 = vld [vmem:[%s224 + $0x8] sm:$0xff]
    %v227 = vld [vmem:[%s224 + $0x10] sm:$0xff]
    %v228 = vld [vmem:[%s224 + $0x18] sm:$0xff]
    %v229 = vld [vmem:[%s224 + $0x20] sm:$0xff]
    %v230 = vld [vmem:[%s224 + $0x28] sm:$0xff]
    %v231 = vld [vmem:[%s224 + $0x30] sm:$0xff]
    %v232 = vld [vmem:[%s224 + $0x38] sm:$0xff]
    %v233 = vld [vmem:[%s224 + $0x40] sm:$0xff]
    %v234 = vld [vmem:[%s224 + $0x48] sm:$0xff]
    %v235 = vld [vmem:[%s224 + $0x50] sm:$0xff]
    %v236 = vld [vmem:[%s224 + $0x58] sm:$0xff]
    %v237 = vld [vmem:[%s224 + $0x60] sm:$0xff]
    %v238 = vld [vmem:[%s224 + $0x68] sm:$0xff]
    %v239 = vld [vmem:[%s224 + $0x70] sm:$0xff]
    %v240 = vld [vmem:[%s224 + $0x78] sm:$0xff]
    %241 = vmatprep.subr.mxu0 0.0
    %242 = vmatpush1.msra.mxu0 %v225
    %243 = vmatprep.subr.mxu0 0.0
    %244 = vmatpush1.msra.mxu0 %v226
    %245 = vmatprep.subr.mxu0 0.0
    %246 = vmatpush1.msra.mxu0 %v227
    %247 = vmatprep.subr.mxu0 0.0
    %248 = vmatpush1.msra.mxu0 %v228
    %249 = vmatprep.subr.mxu0 0.0
    %250 = vmatpush1.msra.mxu0 %v229
    %251 = vmatprep.subr.mxu0 0.0
    %252 = vmatpush1.msra.mxu0 %v230
    %253 = vmatprep.subr.mxu0 0.0
    %254 = vmatpush1.msra.mxu0 %v231
    %255 = vmatprep.subr.mxu0 0.0
    %256 = vmatpush1.msra.mxu0 %v232
    %257 = vmatprep.subr.mxu0 0.0
    %258 = vmatpush1.msra.mxu0 %v233
    %259 = vmatprep.subr.mxu0 0.0
    %260 = vmatpush1.msra.mxu0 %v234
    %261 = vmatprep.subr.mxu0 0.0
    %262 = vmatpush1.msra.mxu0 %v235
    %263 = vmatprep.subr.mxu0 0.0
    %264 = vmatpush1.msra.mxu0 %v236
    %265 = vmatprep.subr.mxu0 0.0
    %266 = vmatpush1.msra.mxu0 %v237
    %267 = vmatprep.subr.mxu0 0.0
    %268 = vmatpush1.msra.mxu0 %v238
    %269 = vmatprep.subr.mxu0 0.0
    %270 = vmatpush1.msra.mxu0 %v239
    %271 = vmatprep.subr.mxu0 0.0
    %272 = vmatpush1.msra.mxu0 %v240
    %273 = vmatprep.subr.mxu0 0.0
    %274 = vmatpush1.msra.mxu0 0.0
    %275 = vmatprep.subr.mxu0 0.0
    %276 = vmatpush1.msra.mxu0 0.0
    %277 = vmatprep.subr.mxu0 0.0
    %278 = vmatpush1.msra.mxu0 0.0
    %279 = vmatprep.subr.mxu0 0.0
    %280 = vmatpush1.msra.mxu0 0.0
    %281 = vmatprep.subr.mxu0 0.0
    %282 = vmatpush1.msra.mxu0 0.0
    %283 = vmatprep.subr.mxu0 0.0
    %284 = vmatpush1.msra.mxu0 0.0
    %285 = vmatprep.subr.mxu0 0.0
    %286 = vmatpush1.msra.mxu0 0.0
    %287 = vmatprep.subr.mxu0 0.0
    %288 = vmatpush1.msra.mxu0 0.0
    %289 = vmatprep.subr.mxu0 0.0
    %290 = vmatpush1.msra.mxu0 0.0
    %291 = vmatprep.subr.mxu0 0.0
    %292 = vmatpush1.msra.mxu0 0.0
    %293 = vmatprep.subr.mxu0 0.0
    %294 = vmatpush1.msra.mxu0 0.0
    %295 = vmatprep.subr.mxu0 0.0
    %296 = vmatpush1.msra.mxu0 0.0
    %297 = vmatprep.subr.mxu0 0.0
    %298 = vmatpush1.msra.mxu0 0.0
    %299 = vmatprep.subr.mxu0 0.0
    %300 = vmatpush1.msra.mxu0 0.0
    %301 = vmatprep.subr.mxu0 0.0
    %302 = vmatpush1.msra.mxu0 0.0
    %303 = vmatprep.subr.mxu0 0.0
    %304 = vmatpush1.msra.mxu0 0.0
    %305 = vmatprep.mubr.f32.mxu0 0.0
    %306 = vmatmul.mubr.f32.gmra.mrb[0].mxu0 %v85
    %v307 = vpop.f32.mrb[0].mxu0
    %v308 = vadd.f32 0.0, %v307
    %v309 = vpop.f32.mrb[0].mxu0
    %310 = vmatprep.mubr.f32.mxu0 0.0
    %311 = vmatmul.mubr.f32.gmra.mrb[0].mxu0 %v86
    %v312 = vpop.f32.mrb[0].mxu0
    %v313 = vadd.f32 0.0, %v312
    %v314 = vpop.f32.mrb[0].mxu0
    %315 = vmatprep.mubr.f32.mxu0 0.0
    %316 = vmatmul.mubr.f32.gmra.mrb[0].mxu0 %v87
    %v317 = vpop.f32.mrb[0].mxu0
    %v318 = vadd.f32 0.0, %v317
    %v319 = vpop.f32.mrb[0].mxu0
    %320 = vmatprep.mubr.f32.mxu0 0.0
    %321 = vmatmul.mubr.f32.gmra.mrb[0].mxu0 %v88
    %v322 = vpop.f32.mrb[0].mxu0
    %v323 = vadd.f32 0.0, %v322
    %v324 = vpop.f32.mrb[0].mxu0
    %325 = vdwg.mxu0
    %326 = vmatprep.subr.mxu0 0.0
    %327 = vmatpush1.msra.mxu0 %v208
    %328 = vmatprep.subr.mxu0 0.0
    %329 = vmatpush1.msra.mxu0 %v209
    %330 = vmatprep.subr.mxu0 0.0
    %331 = vmatpush1.msra.mxu0 %v210
    %332 = vmatprep.subr.mxu0 0.0
    %333 = vmatpush1.msra.mxu0 %v211
    %334 = vmatprep.subr.mxu0 0.0
    %335 = vmatpush1.msra.mxu0 %v212
    %336 = vmatprep.subr.mxu0 0.0
    %337 = vmatpush1.msra.mxu0 %v213
    %338 = vmatprep.subr.mxu0 0.0
    %339 = vmatpush1.msra.mxu0 %v214
    %340 = vmatprep.subr.mxu0 0.0
    %341 = vmatpush1.msra.mxu0 %v215
    %342 = vmatprep.subr.mxu0 0.0
    %343 = vmatpush1.msra.mxu0 %v216
    %344 = vmatprep.subr.mxu0 0.0
    %345 = vmatpush1.msra.mxu0 %v217
    %346 = vmatprep.subr.mxu0 0.0
    %347 = vmatpush1.msra.mxu0 %v218
    %348 = vmatprep.subr.mxu0 0.0
    %349 = vmatpush1.msra.mxu0 %v219
    %350 = vmatprep.subr.mxu0 0.0
    %351 = vmatpush1.msra.mxu0 %v220
    %352 = vmatprep.subr.mxu0 0.0
    %353 = vmatpush1.msra.mxu0 %v221
    %354 = vmatprep.subr.mxu0 0.0
    %355 = vmatpush1.msra.mxu0 %v222
    %356 = vmatprep.subr.mxu0 0.0
    %357 = vmatpush1.msra.mxu0 %v223
    %358 = vmatprep.subr.mxu0 0.0
    %359 = vmatpush1.msra.mxu0 0.0
    %360 = vmatprep.subr.mxu0 0.0
    %361 = vmatpush1.msra.mxu0 0.0
    %362 = vmatprep.subr.mxu0 0.0
    %363 = vmatpush1.msra.mxu0 0.0
    %364 = vmatprep.subr.mxu0 0.0
    %365 = vmatpush1.msra.mxu0 0.0
    %366 = vmatprep.subr.mxu0 0.0
    %367 = vmatpush1.msra.mxu0 0.0
    %368 = vmatprep.subr.mxu0 0.0
    %369 = vmatpush1.msra.mxu0 0.0
    %370 = vmatprep.subr.mxu0 0.0
    %371 = vmatpush1.msra.mxu0 0.0
    %372 = vmatprep.subr.mxu0 0.0
    %373 = vmatpush1.msra.mxu0 0.0
    %374 = vmatprep.subr.mxu0 0.0
    %375 = vmatpush1.msra.mxu0 0.0
    %376 = vmatprep.subr.mxu0 0.0
    %377 = vmatpush1.msra.mxu0 0.0
    %378 = vmatprep.subr.mxu0 0.0
    %379 = vmatpush1.msra.mxu0 0.0
    %380 = vmatprep.subr.mxu0 0.0
    %381 = vmatpush1.msra.mxu0 0.0
    %382 = vmatprep.subr.mxu0 0.0
    %383 = vmatpush1.msra.mxu0 0.0
    %384 = vmatprep.subr.mxu0 0.0
    %385 = vmatpush1.msra.mxu0 0.0
    %386 = vmatprep.subr.mxu0 0.0
    %387 = vmatpush1.msra.mxu0 0.0
    %388 = vmatprep.subr.mxu0 0.0
    %389 = vmatpush1.msra.mxu0 0.0
    %390 = vmatprep.mubr.f32.mxu0 0.0
    %391 = vmatmul.mubr.f32.gmra.mrb[0].mxu0 %v191
    %v392 = vpop.f32.mrb[0].mxu0
    %v393 = vadd.f32 %v308, %v392
    %v394 = vpop.f32.mrb[0].mxu0
    %395 = vmatprep.mubr.f32.mxu0 0.0
    %396 = vmatmul.mubr.f32.gmra.mrb[0].mxu0 %v192
    %v397 = vpop.f32.mrb[0].mxu0
    %v398 = vadd.f32 %v313, %v397
    %v399 = vpop.f32.mrb[0].mxu0
    %400 = vmatprep.mubr.f32.mxu0 0.0
    %401 = vmatmul.mubr.f32.gmra.mrb[0].mxu0 %v193
    %v402 = vpop.f32.mrb[0].mxu0
    %v403 = vadd.f32 %v318, %v402
    %v404 = vpop.f32.mrb[0].mxu0
    %405 = vmatprep.mubr.f32.mxu0 0.0
    %406 = vmatmul.mubr.f32.gmra.mrb[0].mxu0 %v194
    %v407 = vpop.f32.mrb[0].mxu0
    %v408 = vadd.f32 %v323, %v407
    %v409 = vpop.f32.mrb[0].mxu0
    %410 = vdwg.mxu0
    %s411 = scalar_lea.vmem [#allocation5], 256
    %v412 = vld [vmem:[%s411] sm:$0xff]
    %v413 = vld [vmem:[%s411 + $0x8] sm:$0xff]
    %v414 = vld [vmem:[%s411 + $0x10] sm:$0xff]
    %v415 = vld [vmem:[%s411 + $0x18] sm:$0xff]
    %v416 = vld [vmem:[%s411 + $0x20] sm:$0xff]
    %v417 = vld [vmem:[%s411 + $0x28] sm:$0xff]
    %v418 = vld [vmem:[%s411 + $0x30] sm:$0xff]
    %v419 = vld [vmem:[%s411 + $0x38] sm:$0xff]
    %v420 = vld [vmem:[%s411 + $0x40] sm:$0xff]
    %v421 = vld [vmem:[%s411 + $0x48] sm:$0xff]
    %v422 = vld [vmem:[%s411 + $0x50] sm:$0xff]
    %v423 = vld [vmem:[%s411 + $0x58] sm:$0xff]
    %v424 = vld [vmem:[%s411 + $0x60] sm:$0xff]
    %v425 = vld [vmem:[%s411 + $0x68] sm:$0xff]
    %v426 = vld [vmem:[%s411 + $0x70] sm:$0xff]
    %v427 = vld [vmem:[%s411 + $0x78] sm:$0xff]
    %428 = vmatprep.subr.mxu0 0.0
    %429 = vmatpush1.msra.mxu0 %v412
    %430 = vmatprep.subr.mxu0 0.0
    %431 = vmatpush1.msra.mxu0 %v413
    %432 = vmatprep.subr.mxu0 0.0
    %433 = vmatpush1.msra.mxu0 %v414
    %434 = vmatprep.subr.mxu0 0.0
    %435 = vmatpush1.msra.mxu0 %v415
    %436 = vmatprep.subr.mxu0 0.0
    %437 = vmatpush1.msra.mxu0 %v416
    %438 = vmatprep.subr.mxu0 0.0
    %439 = vmatpush1.msra.mxu0 %v417
    %440 = vmatprep.subr.mxu0 0.0
    %441 = vmatpush1.msra.mxu0 %v418
    %442 = vmatprep.subr.mxu0 0.0
    %443 = vmatpush1.msra.mxu0 %v419
    %444 = vmatprep.subr.mxu0 0.0
    %445 = vmatpush1.msra.mxu0 %v420
    %446 = vmatprep.subr.mxu0 0.0
    %447 = vmatpush1.msra.mxu0 %v421
    %448 = vmatprep.subr.mxu0 0.0
    %449 = vmatpush1.msra.mxu0 %v422
    %450 = vmatprep.subr.mxu0 0.0
    %451 = vmatpush1.msra.mxu0 %v423
    %452 = vmatprep.subr.mxu0 0.0
    %453 = vmatpush1.msra.mxu0 %v424
    %454 = vmatprep.subr.mxu0 0.0
    %455 = vmatpush1.msra.mxu0 %v425
    %456 = vmatprep.subr.mxu0 0.0
    %457 = vmatpush1.msra.mxu0 %v426
    %458 = vmatprep.subr.mxu0 0.0
    %459 = vmatpush1.msra.mxu0 %v427
    %460 = vmatprep.subr.mxu0 0.0
    %461 = vmatpush1.msra.mxu0 0.0
    %462 = vmatprep.subr.mxu0 0.0
    %463 = vmatpush1.msra.mxu0 0.0
    %464 = vmatprep.subr.mxu0 0.0
    %465 = vmatpush1.msra.mxu0 0.0
    %466 = vmatprep.subr.mxu0 0.0
    %467 = vmatpush1.msra.mxu0 0.0
    %468 = vmatprep.subr.mxu0 0.0
    %469 = vmatpush1.msra.mxu0 0.0
    %470 = vmatprep.subr.mxu0 0.0
    %471 = vmatpush1.msra.mxu0 0.0
    %472 = vmatprep.subr.mxu0 0.0
    %473 = vmatpush1.msra.mxu0 0.0
    %474 = vmatprep.subr.mxu0 0.0
    %475 = vmatpush1.msra.mxu0 0.0
    %476 = vmatprep.subr.mxu0 0.0
    %477 = vmatpush1.msra.mxu0 0.0
    %478 = vmatprep.subr.mxu0 0.0
    %479 = vmatpush1.msra.mxu0 0.0
    %480 = vmatprep.subr.mxu0 0.0
    %481 = vmatpush1.msra.mxu0 0.0
    %482 = vmatprep.subr.mxu0 0.0
    %483 = vmatpush1.msra.mxu0 0.0
    %484 = vmatprep.subr.mxu0 0.0
    %485 = vmatpush1.msra.mxu0 0.0
    %486 = vmatprep.subr.mxu0 0.0
    %487 = vmatpush1.msra.mxu0 0.0
    %488 = vmatprep.subr.mxu0 0.0
    %489 = vmatpush1.msra.mxu0 0.0
    %490 = vmatprep.subr.mxu0 0.0
    %491 = vmatpush1.msra.mxu0 0.0
    %492 = vmatprep.mubr.f32.mxu0 0.0
    %493 = vmatmul.mubr.f32.gmra.mrb[0].mxu0 %v204
    %v494 = vpop.f32.mrb[0].mxu0
    %v495 = vadd.f32 0.0, %v494
    %v496 = vpop.f32.mrb[0].mxu0
    %497 = vmatprep.mubr.f32.mxu0 0.0
    %498 = vmatmul.mubr.f32.gmra.mrb[0].mxu0 %v205
    %v499 = vpop.f32.mrb[0].mxu0
    %v500 = vadd.f32 0.0, %v499
    %v501 = vpop.f32.mrb[0].mxu0
    %502 = vmatprep.mubr.f32.mxu0 0.0
    %503 = vmatmul.mubr.f32.gmra.mrb[0].mxu0 %v206
    %v504 = vpop.f32.mrb[0].mxu0
    %v505 = vadd.f32 0.0, %v504
    %v506 = vpop.f32.mrb[0].mxu0
    %507 = vmatprep.mubr.f32.mxu0 0.0
    %508 = vmatmul.mubr.f32.gmra.mrb[0].mxu0 %v207
    %v509 = vpop.f32.mrb[0].mxu0
    %v510 = vadd.f32 0.0, %v509
    %v511 = vpop.f32.mrb[0].mxu0
    %512 = vdwg.mxu0
    %v513 = vadd.f32 %v393, %v495
    %v514 = vadd.f32 %v398, %v500
    %v515 = vadd.f32 %v403, %v505
    %v516 = vadd.f32 %v408, %v510
    %v517 = vadd.f32 %v513, %v514
    %v518 = vadd.f32 %v517, %v515
    %v519 = vadd.f32 %v518, %v516
    %v520 = vrot.slane %v519, 4
    %v521 = vadd.f32 %v519, %v520
    %v522 = vrot.slane %v521, 2
    %v523 = vadd.f32 %v521, %v522
    %v524 = vrot.slane %v523, 1
    %v525 = vadd.f32 %v523, %v524
    %v526 = vmul.f32 %v513, %v513
    %v527 = vmul.f32 %v514, %v514
    %v528 = vmul.f32 %v515, %v515
    %v529 = vmul.f32 %v516, %v516
    %v530 = vadd.f32 %v526, %v527
    %v531 = vadd.f32 %v530, %v528
    %v532 = vadd.f32 %v531, %v529
    %v533 = vrot.slane %v532, 4
    %v534 = vadd.f32 %v532, %v533
    %v535 = vrot.slane %v534, 2
    %v536 = vadd.f32 %v534, %v535
    %v537 = vrot.slane %v536, 1
    %v538 = vadd.f32 %v536, %v537
    %539 = vmatprep.subr.mxu0 0.0
    %540 = vmatpush1.msra.mxu0 %v89
    %541 = vmatprep.subr.mxu0 0.0
    %542 = vmatpush1.msra.mxu0 %v90
    %543 = vmatprep.subr.mxu0 0.0
    %544 = vmatpush1.msra.mxu0 %v91
    %545 = vmatprep.subr.mxu0 0.0
    %546 = vmatpush1.msra.mxu0 %v92
    %547 = vmatprep.subr.mxu0 0.0
    %548 = vmatpush1.msra.mxu0 %v93
    %549 = vmatprep.subr.mxu0 0.0
    %550 = vmatpush1.msra.mxu0 %v94
    %551 = vmatprep.subr.mxu0 0.0
    %552 = vmatpush1.msra.mxu0 %v95
    %553 = vmatprep.subr.mxu0 0.0
    %554 = vmatpush1.msra.mxu0 %v96
    %555 = vmatprep.subr.mxu0 0.0
    %556 = vmatpush1.msra.mxu0 %v97
    %557 = vmatprep.subr.mxu0 0.0
    %558 = vmatpush1.msra.mxu0 %v98
    %559 = vmatprep.subr.mxu0 0.0
    %560 = vmatpush1.msra.mxu0 %v99
    %561 = vmatprep.subr.mxu0 0.0
    %562 = vmatpush1.msra.mxu0 %v100
    %563 = vmatprep.subr.mxu0 0.0
    %564 = vmatpush1.msra.mxu0 %v101
    %565 = vmatprep.subr.mxu0 0.0
    %566 = vmatpush1.msra.mxu0 %v102
    %567 = vmatprep.subr.mxu0 0.0
    %568 = vmatpush1.msra.mxu0 %v103
    %569 = vmatprep.subr.mxu0 0.0
    %570 = vmatpush1.msra.mxu0 %v104
    %571 = vmatprep.subr.mxu0 0.0
    %572 = vmatpush1.msra.mxu0 0.0
    %573 = vmatprep.subr.mxu0 0.0
    %574 = vmatpush1.msra.mxu0 0.0
    %575 = vmatprep.subr.mxu0 0.0
    %576 = vmatpush1.msra.mxu0 0.0
    %577 = vmatprep.subr.mxu0 0.0
    %578 = vmatpush1.msra.mxu0 0.0
    %579 = vmatprep.subr.mxu0 0.0
    %580 = vmatpush1.msra.mxu0 0.0
    %581 = vmatprep.subr.mxu0 0.0
    %582 = vmatpush1.msra.mxu0 0.0
    %583 = vmatprep.subr.mxu0 0.0
    %584 = vmatpush1.msra.mxu0 0.0
    %585 = vmatprep.subr.mxu0 0.0
    %586 = vmatpush1.msra.mxu0 0.0
    %587 = vmatprep.subr.mxu0 0.0
    %588 = vmatpush1.msra.mxu0 0.0
    %589 = vmatprep.subr.mxu0 0.0
    %590 = vmatpush1.msra.mxu0 0.0
    %591 = vmatprep.subr.mxu0 0.0
    %592 = vmatpush1.msra.mxu0 0.0
    %593 = vmatprep.subr.mxu0 0.0
    %594 = vmatpush1.msra.mxu0 0.0
    %595 = vmatprep.subr.mxu0 0.0
    %596 = vmatpush1.msra.mxu0 0.0
    %597 = vmatprep.subr.mxu0 0.0
    %598 = vmatpush1.msra.mxu0 0.0
    %599 = vmatprep.subr.mxu0 0.0
    %600 = vmatpush1.msra.mxu0 0.0
    %601 = vmatprep.subr.mxu0 0.0
    %602 = vmatpush1.msra.mxu0 0.0
    %603 = vmatprep.mubr.f32.mxu0 0.0
    %604 = vmatmul.mubr.f32.gmra.mrb[0].mxu0 %v525
    %v605 = vpop.f32.mrb[0].mxu0
    %v606 = vadd.f32 0.0, %v605
    %v607 = vpop.f32.mrb[0].mxu0
    %608 = vdwg.mxu0
    %v609 = vmul.f32 %v606, 0.001953125
    %610 = vmatprep.subr.mxu0 0.0
    %611 = vmatpush1.msra.mxu0 %v89
    %612 = vmatprep.subr.mxu0 0.0
    %613 = vmatpush1.msra.mxu0 %v90
    %614 = vmatprep.subr.mxu0 0.0
    %615 = vmatpush1.msra.mxu0 %v91
    %616 = vmatprep.subr.mxu0 0.0
    %617 = vmatpush1.msra.mxu0 %v92
    %618 = vmatprep.subr.mxu0 0.0
    %619 = vmatpush1.msra.mxu0 %v93
    %620 = vmatprep.subr.mxu0 0.0
    %621 = vmatpush1.msra.mxu0 %v94
    %622 = vmatprep.subr.mxu0 0.0
    %623 = vmatpush1.msra.mxu0 %v95
    %624 = vmatprep.subr.mxu0 0.0
    %625 = vmatpush1.msra.mxu0 %v96
    %626 = vmatprep.subr.mxu0 0.0
    %627 = vmatpush1.msra.mxu0 %v97
    %628 = vmatprep.subr.mxu0 0.0
    %629 = vmatpush1.msra.mxu0 %v98
    %630 = vmatprep.subr.mxu0 0.0
    %631 = vmatpush1.msra.mxu0 %v99
    %632 = vmatprep.subr.mxu0 0.0
    %633 = vmatpush1.msra.mxu0 %v100
    %634 = vmatprep.subr.mxu0 0.0
    %635 = vmatpush1.msra.mxu0 %v101
    %636 = vmatprep.subr.mxu0 0.0
    %637 = vmatpush1.msra.mxu0 %v102
    %638 = vmatprep.subr.mxu0 0.0
    %639 = vmatpush1.msra.mxu0 %v103
    %640 = vmatprep.subr.mxu0 0.0
    %641 = vmatpush1.msra.mxu0 %v104
    %642 = vmatprep.subr.mxu0 0.0
    %643 = vmatpush1.msra.mxu0 0.0
    %644 = vmatprep.subr.mxu0 0.0
    %645 = vmatpush1.msra.mxu0 0.0
    %646 = vmatprep.subr.mxu0 0.0
    %647 = vmatpush1.msra.mxu0 0.0
    %648 = vmatprep.subr.mxu0 0.0
    %649 = vmatpush1.msra.mxu0 0.0
    %650 = vmatprep.subr.mxu0 0.0
    %651 = vmatpush1.msra.mxu0 0.0
    %652 = vmatprep.subr.mxu0 0.0
    %653 = vmatpush1.msra.mxu0 0.0
    %654 = vmatprep.subr.mxu0 0.0
    %655 = vmatpush1.msra.mxu0 0.0
    %656 = vmatprep.subr.mxu0 0.0
    %657 = vmatpush1.msra.mxu0 0.0
    %658 = vmatprep.subr.mxu0 0.0
    %659 = vmatpush1.msra.mxu0 0.0
    %660 = vmatprep.subr.mxu0 0.0
    %661 = vmatpush1.msra.mxu0 0.0
    %662 = vmatprep.subr.mxu0 0.0
    %663 = vmatpush1.msra.mxu0 0.0
    %664 = vmatprep.subr.mxu0 0.0
    %665 = vmatpush1.msra.mxu0 0.0
    %666 = vmatprep.subr.mxu0 0.0
    %667 = vmatpush1.msra.mxu0 0.0
    %668 = vmatprep.subr.mxu0 0.0
    %669 = vmatpush1.msra.mxu0 0.0
    %670 = vmatprep.subr.mxu0 0.0
    %671 = vmatpush1.msra.mxu0 0.0
    %672 = vmatprep.subr.mxu0 0.0
    %673 = vmatpush1.msra.mxu0 0.0
    %674 = vmatprep.mubr.f32.mxu0 0.0
    %675 = vmatmul.mubr.f32.gmra.mrb[0].mxu0 %v538
    %v676 = vpop.f32.mrb[0].mxu0
    %v677 = vadd.f32 0.0, %v676
    %v678 = vpop.f32.mrb[0].mxu0
    %679 = vdwg.mxu0
    %v680 = vmul.f32 %v677, 0.001953125
    %v681 = vmul.f32 %v609, %v609
    %v682 = vsub.f32 %v680, %v681
    %v683 = vld [vmem:[%s4] sm:$0x1]
    %v684 = vadd.f32 %v682, 1e-05
    %v685 = vrsqrt.pop %v684
    %v686 = vmul.f32 %v683, %v685
    %v687 = vld [vmem:[%s5] sm:$0x1]
    %v688 = vmul.f32 %v609, %v686
    %v689 = vsub.f32 %v687, %v688
    %v691 = vlaneseq
    %v692 = vshrl.u32 %v691, 7
    %v693 = vsub.s32 0, %v692
    %v694 = vrot.slane %v686, %v693
    %v696 = vmul.f32 %v513, %v694
    %v697 = vmul.f32 %v514, %v694
    %v698 = vmul.f32 %v515, %v694
    %v699 = vmul.f32 %v516, %v694
    %v701 = vlaneseq
    %v702 = vshrl.u32 %v701, 7
    %v703 = vsub.s32 0, %v702
    %v704 = vrot.slane %v689, %v703
    %v706 = vadd.f32 %v696, %v704
    %v707 = vadd.f32 %v697, %v704
    %v708 = vadd.f32 %v698, %v704
    %v709 = vadd.f32 %v699, %v704
    %v710 = vmax.f32 %v706, 0.0
    %v711 = vmax.f32 %v707, 0.0
    %v712 = vmax.f32 %v708, 0.0
    %v713 = vmax.f32 %v709, 0.0
    %v714 = vrot.slane %v710, 7
    %v715 = vrot.slane %v711, 7
    %v716 = vrot.slane %v712, 7
    %v717 = vrot.slane %v713, 7
    %v718 = vsel %vm186, %v716, %v717
    %v719 = vsel %vm186, %v715, %v716
    %v720 = vsel %vm186, %v714, %v715
    %v721 = vsel %vm186, %v717, %v714
    %v722 = vmul.f32 %v721, %v166
    %v723 = vmul.f32 %v720, %v167
    %v724 = vmul.f32 %v719, %v168
    %v725 = vmul.f32 %v718, %v169
    %v726 = vrot.slane %v710, 1
    %v727 = vrot.slane %v711, 1
    %v728 = vrot.slane %v712, 1
    %v729 = vrot.slane %v713, 1
    %v730 = vsel %vm199, %v728, %v729
    %v731 = vsel %vm199, %v727, %v728
    %v732 = vsel %vm199, %v726, %v727
    %v733 = vsel %vm199, %v729, %v726
    %v734 = vmul.f32 %v732, %v178
    %v735 = vmul.f32 %v731, %v179
    %v736 = vmul.f32 %v730, %v180
    %v737 = vmul.f32 %v733, %v181
    %v738 = vld [vmem:[#allocation7] sm:$0xff]
    %v739 = vld [vmem:[#allocation7 + $0x8] sm:$0xff]
    %v740 = vld [vmem:[#allocation7 + $0x10] sm:$0xff]
    %v741 = vld [vmem:[#allocation7 + $0x18] sm:$0xff]
    %v742 = vld [vmem:[#allocation7 + $0x20] sm:$0xff]
    %v743 = vld [vmem:[#allocation7 + $0x28] sm:$0xff]
    %v744 = vld [vmem:[#allocation7 + $0x30] sm:$0xff]
    %v745 = vld [vmem:[#allocation7 + $0x38] sm:$0xff]
    %v746 = vld [vmem:[#allocation7 + $0x40] sm:$0xff]
    %v747 = vld [vmem:[#allocation7 + $0x48] sm:$0xff]
    %v748 = vld [vmem:[#allocation7 + $0x50] sm:$0xff]
    %v749 = vld [vmem:[#allocation7 + $0x58] sm:$0xff]
    %v750 = vld [vmem:[#allocation7 + $0x60] sm:$0xff]
    %v751 = vld [vmem:[#allocation7 + $0x68] sm:$0xff]
    %v752 = vld [vmem:[#allocation7 + $0x70] sm:$0xff]
    %v753 = vld [vmem:[#allocation7 + $0x78] sm:$0xff]
    %s754 = scalar_lea.vmem [#allocation7], 128
    %v755 = vld [vmem:[%s754] sm:$0xff]
    %v756 = vld [vmem:[%s754 + $0x8] sm:$0xff]
    %v757 = vld [vmem:[%s754 + $0x10] sm:$0xff]
    %v758 = vld [vmem:[%s754 + $0x18] sm:$0xff]
    %v759 = vld [vmem:[%s754 + $0x20] sm:$0xff]
    %v760 = vld [vmem:[%s754 + $0x28] sm:$0xff]
    %v761 = vld [vmem:[%s754 + $0x30] sm:$0xff]
    %v762 = vld [vmem:[%s754 + $0x38] sm:$0xff]
    %v763 = vld [vmem:[%s754 + $0x40] sm:$0xff]
    %v764 = vld [vmem:[%s754 + $0x48] sm:$0xff]
    %v765 = vld [vmem:[%s754 + $0x50] sm:$0xff]
    %v766 = vld [vmem:[%s754 + $0x58] sm:$0xff]
    %v767 = vld [vmem:[%s754 + $0x60] sm:$0xff]
    %v768 = vld [vmem:[%s754 + $0x68] sm:$0xff]
    %v769 = vld [vmem:[%s754 + $0x70] sm:$0xff]
    %v770 = vld [vmem:[%s754 + $0x78] sm:$0xff]
    %771 = vmatprep.subr.mxu0 0.0
    %772 = vmatpush1.msra.mxu0 %v755
    %773 = vmatprep.subr.mxu0 0.0
    %774 = vmatpush1.msra.mxu0 %v756
    %775 = vmatprep.subr.mxu0 0.0
    %776 = vmatpush1.msra.mxu0 %v757
    %777 = vmatprep.subr.mxu0 0.0
    %778 = vmatpush1.msra.mxu0 %v758
    %779 = vmatprep.subr.mxu0 0.0
    %780 = vmatpush1.msra.mxu0 %v759
    %781 = vmatprep.subr.mxu0 0.0
    %782 = vmatpush1.msra.mxu0 %v760
    %783 = vmatprep.subr.mxu0 0.0
    %784 = vmatpush1.msra.mxu0 %v761
    %785 = vmatprep.subr.mxu0 0.0
    %786 = vmatpush1.msra.mxu0 %v762
    %787 = vmatprep.subr.mxu0 0.0
    %788 = vmatpush1.msra.mxu0 %v763
    %789 = vmatprep.subr.mxu0 0.0
    %790 = vmatpush1.msra.mxu0 %v764
    %791 = vmatprep.subr.mxu0 0.0
    %792 = vmatpush1.msra.mxu0 %v765
    %793 = vmatprep.subr.mxu0 0.0
    %794 = vmatpush1.msra.mxu0 %v766
    %795 = vmatprep.subr.mxu0 0.0
    %796 = vmatpush1.msra.mxu0 %v767
    %797 = vmatprep.subr.mxu0 0.0
    %798 = vmatpush1.msra.mxu0 %v768
    %799 = vmatprep.subr.mxu0 0.0
    %800 = vmatpush1.msra.mxu0 %v769
    %801 = vmatprep.subr.mxu0 0.0
    %802 = vmatpush1.msra.mxu0 %v770
    %803 = vmatprep.subr.mxu0 0.0
    %804 = vmatpush1.msra.mxu0 0.0
    %805 = vmatprep.subr.mxu0 0.0
    %806 = vmatpush1.msra.mxu0 0.0
    %807 = vmatprep.subr.mxu0 0.0
    %808 = vmatpush1.msra.mxu0 0.0
    %809 = vmatprep.subr.mxu0 0.0
    %810 = vmatpush1.msra.mxu0 0.0
    %811 = vmatprep.subr.mxu0 0.0
    %812 = vmatpush1.msra.mxu0 0.0
    %813 = vmatprep.subr.mxu0 0.0
    %814 = vmatpush1.msra.mxu0 0.0
    %815 = vmatprep.subr.mxu0 0.0
    %816 = vmatpush1.msra.mxu0 0.0
    %817 = vmatprep.subr.mxu0 0.0
    %818 = vmatpush1.msra.mxu0 0.0
    %819 = vmatprep.subr.mxu0 0.0
    %820 = vmatpush1.msra.mxu0 0.0
    %821 = vmatprep.subr.mxu0 0.0
    %822 = vmatpush1.msra.mxu0 0.0
    %823 = vmatprep.subr.mxu0 0.0
    %824 = vmatpush1.msra.mxu0 0.0
    %825 = vmatprep.subr.mxu0 0.0
    %826 = vmatpush1.msra.mxu0 0.0
    %827 = vmatprep.subr.mxu0 0.0
    %828 = vmatpush1.msra.mxu0 0.0
    %829 = vmatprep.subr.mxu0 0.0
    %830 = vmatpush1.msra.mxu0 0.0
    %831 = vmatprep.subr.mxu0 0.0
    %832 = vmatpush1.msra.mxu0 0.0
    %833 = vmatprep.subr.mxu0 0.0
    %834 = vmatpush1.msra.mxu0 0.0
    %835 = vmatprep.mubr.f32.mxu0 0.0
    %836 = vmatmul.mubr.f32.gmra.mrb[0].mxu0 %v710
    %v837 = vpop.f32.mrb[0].mxu0
    %v838 = vadd.f32 0.0, %v837
    %v839 = vpop.f32.mrb[0].mxu0
    %840 = vmatprep.mubr.f32.mxu0 0.0
    %841 = vmatmul.mubr.f32.gmra.mrb[0].mxu0 %v711
    %v842 = vpop.f32.mrb[0].mxu0
    %v843 = vadd.f32 0.0, %v842
    %v844 = vpop.f32.mrb[0].mxu0
    %845 = vmatprep.mubr.f32.mxu0 0.0
    %846 = vmatmul.mubr.f32.gmra.mrb[0].mxu0 %v712
    %v847 = vpop.f32.mrb[0].mxu0
    %v848 = vadd.f32 0.0, %v847
    %v849 = vpop.f32.mrb[0].mxu0
    %850 = vmatprep.mubr.f32.mxu0 0.0
    %851 = vmatmul.mubr.f32.gmra.mrb[0].mxu0 %v713
    %v852 = vpop.f32.mrb[0].mxu0
    %v853 = vadd.f32 0.0, %v852
    %v854 = vpop.f32.mrb[0].mxu0
    %855 = vdwg.mxu0
    %856 = vmatprep.subr.mxu0 0.0
    %857 = vmatpush1.msra.mxu0 %v738
    %858 = vmatprep.subr.mxu0 0.0
    %859 = vmatpush1.msra.mxu0 %v739
    %860 = vmatprep.subr.mxu0 0.0
    %861 = vmatpush1.msra.mxu0 %v740
    %862 = vmatprep.subr.mxu0 0.0
    %863 = vmatpush1.msra.mxu0 %v741
    %864 = vmatprep.subr.mxu0 0.0
    %865 = vmatpush1.msra.mxu0 %v742
    %866 = vmatprep.subr.mxu0 0.0
    %867 = vmatpush1.msra.mxu0 %v743
    %868 = vmatprep.subr.mxu0 0.0
    %869 = vmatpush1.msra.mxu0 %v744
    %870 = vmatprep.subr.mxu0 0.0
    %871 = vmatpush1.msra.mxu0 %v745
    %872 = vmatprep.subr.mxu0 0.0
    %873 = vmatpush1.msra.mxu0 %v746
    %874 = vmatprep.subr.mxu0 0.0
    %875 = vmatpush1.msra.mxu0 %v747
    %876 = vmatprep.subr.mxu0 0.0
    %877 = vmatpush1.msra.mxu0 %v748
    %878 = vmatprep.subr.mxu0 0.0
    %879 = vmatpush1.msra.mxu0 %v749
    %880 = vmatprep.subr.mxu0 0.0
    %881 = vmatpush1.msra.mxu0 %v750
    %882 = vmatprep.subr.mxu0 0.0
    %883 = vmatpush1.msra.mxu0 %v751
    %884 = vmatprep.subr.mxu0 0.0
    %885 = vmatpush1.msra.mxu0 %v752
    %886 = vmatprep.subr.mxu0 0.0
    %887 = vmatpush1.msra.mxu0 %v753
    %888 = vmatprep.subr.mxu0 0.0
    %889 = vmatpush1.msra.mxu0 0.0
    %890 = vmatprep.subr.mxu0 0.0
    %891 = vmatpush1.msra.mxu0 0.0
    %892 = vmatprep.subr.mxu0 0.0
    %893 = vmatpush1.msra.mxu0 0.0
    %894 = vmatprep.subr.mxu0 0.0
    %895 = vmatpush1.msra.mxu0 0.0
    %896 = vmatprep.subr.mxu0 0.0
    %897 = vmatpush1.msra.mxu0 0.0
    %898 = vmatprep.subr.mxu0 0.0
    %899 = vmatpush1.msra.mxu0 0.0
    %900 = vmatprep.subr.mxu0 0.0
    %901 = vmatpush1.msra.mxu0 0.0
    %902 = vmatprep.subr.mxu0 0.0
    %903 = vmatpush1.msra.mxu0 0.0
    %904 = vmatprep.subr.mxu0 0.0
    %905 = vmatpush1.msra.mxu0 0.0
    %906 = vmatprep.subr.mxu0 0.0
    %907 = vmatpush1.msra.mxu0 0.0
    %908 = vmatprep.subr.mxu0 0.0
    %909 = vmatpush1.msra.mxu0 0.0
    %910 = vmatprep.subr.mxu0 0.0
    %911 = vmatpush1.msra.mxu0 0.0
    %912 = vmatprep.subr.mxu0 0.0
    %913 = vmatpush1.msra.mxu0 0.0
    %914 = vmatprep.subr.mxu0 0.0
    %915 = vmatpush1.msra.mxu0 0.0
    %916 = vmatprep.subr.mxu0 0.0
    %917 = vmatpush1.msra.mxu0 0.0
    %918 = vmatprep.subr.mxu0 0.0
    %919 = vmatpush1.msra.mxu0 0.0
    %920 = vmatprep.mubr.f32.mxu0 0.0
    %921 = vmatmul.mubr.f32.gmra.mrb[0].mxu0 %v722
    %v922 = vpop.f32.mrb[0].mxu0
    %v923 = vadd.f32 %v838, %v922
    %v924 = vpop.f32.mrb[0].mxu0
    %925 = vmatprep.mubr.f32.mxu0 0.0
    %926 = vmatmul.mubr.f32.gmra.mrb[0].mxu0 %v723
    %v927 = vpop.f32.mrb[0].mxu0
    %v928 = vadd.f32 %v843, %v927
    %v929 = vpop.f32.mrb[0].mxu0
    %930 = vmatprep.mubr.f32.mxu0 0.0
    %931 = vmatmul.mubr.f32.gmra.mrb[0].mxu0 %v724
    %v932 = vpop.f32.mrb[0].mxu0
    %v933 = vadd.f32 %v848, %v932
    %v934 = vpop.f32.mrb[0].mxu0
    %935 = vmatprep.mubr.f32.mxu0 0.0
    %936 = vmatmul.mubr.f32.gmra.mrb[0].mxu0 %v725
    %v937 = vpop.f32.mrb[0].mxu0
    %v938 = vadd.f32 %v853, %v937
    %v939 = vpop.f32.mrb[0].mxu0
    %940 = vdwg.mxu0
    %s941 = scalar_lea.vmem [#allocation7], 256
    %v942 = vld [vmem:[%s941] sm:$0xff]
    %v943 = vld [vmem:[%s941 + $0x8] sm:$0xff]
    %v944 = vld [vmem:[%s941 + $0x10] sm:$0xff]
    %v945 = vld [vmem:[%s941 + $0x18] sm:$0xff]
    %v946 = vld [vmem:[%s941 + $0x20] sm:$0xff]
    %v947 = vld [vmem:[%s941 + $0x28] sm:$0xff]
    %v948 = vld [vmem:[%s941 + $0x30] sm:$0xff]
    %v949 = vld [vmem:[%s941 + $0x38] sm:$0xff]
    %v950 = vld [vmem:[%s941 + $0x40] sm:$0xff]
    %v951 = vld [vmem:[%s941 + $0x48] sm:$0xff]
    %v952 = vld [vmem:[%s941 + $0x50] sm:$0xff]
    %v953 = vld [vmem:[%s941 + $0x58] sm:$0xff]
    %v954 = vld [vmem:[%s941 + $0x60] sm:$0xff]
    %v955 = vld [vmem:[%s941 + $0x68] sm:$0xff]
    %v956 = vld [vmem:[%s941 + $0x70] sm:$0xff]
    %v957 = vld [vmem:[%s941 + $0x78] sm:$0xff]
    %958 = vmatprep.subr.mxu0 0.0
    %959 = vmatpush1.msra.mxu0 %v942
    %960 = vmatprep.subr.mxu0 0.0
    %961 = vmatpush1.msra.mxu0 %v943
    %962 = vmatprep.subr.mxu0 0.0
    %963 = vmatpush1.msra.mxu0 %v944
    %964 = vmatprep.subr.mxu0 0.0
    %965 = vmatpush1.msra.mxu0 %v945
    %966 = vmatprep.subr.mxu0 0.0
    %967 = vmatpush1.msra.mxu0 %v946
    %968 = vmatprep.subr.mxu0 0.0
    %969 = vmatpush1.msra.mxu0 %v947
    %970 = vmatprep.subr.mxu0 0.0
    %971 = vmatpush1.msra.mxu0 %v948
    %972 = vmatprep.subr.mxu0 0.0
    %973 = vmatpush1.msra.mxu0 %v949
    %974 = vmatprep.subr.mxu0 0.0
    %975 = vmatpush1.msra.mxu0 %v950
    %976 = vmatprep.subr.mxu0 0.0
    %977 = vmatpush1.msra.mxu0 %v951
    %978 = vmatprep.subr.mxu0 0.0
    %979 = vmatpush1.msra.mxu0 %v952
    %980 = vmatprep.subr.mxu0 0.0
    %981 = vmatpush1.msra.mxu0 %v953
    %982 = vmatprep.subr.mxu0 0.0
    %983 = vmatpush1.msra.mxu0 %v954
    %984 = vmatprep.subr.mxu0 0.0
    %985 = vmatpush1.msra.mxu0 %v955
    %986 = vmatprep.subr.mxu0 0.0
    %987 = vmatpush1.msra.mxu0 %v956
    %988 = vmatprep.subr.mxu0 0.0
    %989 = vmatpush1.msra.mxu0 %v957
    %990 = vmatprep.subr.mxu0 0.0
    %991 = vmatpush1.msra.mxu0 0.0
    %992 = vmatprep.subr.mxu0 0.0
    %993 = vmatpush1.msra.mxu0 0.0
    %994 = vmatprep.subr.mxu0 0.0
    %995 = vmatpush1.msra.mxu0 0.0
    %996 = vmatprep.subr.mxu0 0.0
    %997 = vmatpush1.msra.mxu0 0.0
    %998 = vmatprep.subr.mxu0 0.0
    %999 = vmatpush1.msra.mxu0 0.0
    %1000 = vmatprep.subr.mxu0 0.0
    %1001 = vmatpush1.msra.mxu0 0.0
    %1002 = vmatprep.subr.mxu0 0.0
    %1003 = vmatpush1.msra.mxu0 0.0
    %1004 = vmatprep.subr.mxu0 0.0
    %1005 = vmatpush1.msra.mxu0 0.0
    %1006 = vmatprep.subr.mxu0 0.0
    %1007 = vmatpush1.msra.mxu0 0.0
    %1008 = vmatprep.subr.mxu0 0.0
    %1009 = vmatpush1.msra.mxu0 0.0
    %1010 = vmatprep.subr.mxu0 0.0
    %1011 = vmatpush1.msra.mxu0 0.0
    %1012 = vmatprep.subr.mxu0 0.0
    %1013 = vmatpush1.msra.mxu0 0.0
    %1014 = vmatprep.subr.mxu0 0.0
    %1015 = vmatpush1.msra.mxu0 0.0
    %1016 = vmatprep.subr.mxu0 0.0
    %1017 = vmatpush1.msra.mxu0 0.0
    %1018 = vmatprep.subr.mxu0 0.0
    %1019 = vmatpush1.msra.mxu0 0.0
    %1020 = vmatprep.subr.mxu0 0.0
    %1021 = vmatpush1.msra.mxu0 0.0
    %1022 = vmatprep.mubr.f32.mxu0 0.0
    %1023 = vmatmul.mubr.f32.gmra.mrb[0].mxu0 %v734
    %v1024 = vpop.f32.mrb[0].mxu0
    %v1025 = vadd.f32 0.0, %v1024
    %v1026 = vpop.f32.mrb[0].mxu0
    %1027 = vmatprep.mubr.f32.mxu0 0.0
    %1028 = vmatmul.mubr.f32.gmra.mrb[0].mxu0 %v735
    %v1029 = vpop.f32.mrb[0].mxu0
    %v1030 = vadd.f32 0.0, %v1029
    %v1031 = vpop.f32.mrb[0].mxu0
    %1032 = vmatprep.mubr.f32.mxu0 0.0
    %1033 = vmatmul.mubr.f32.gmra.mrb[0].mxu0 %v736
    %v1034 = vpop.f32.mrb[0].mxu0
    %v1035 = vadd.f32 0.0, %v1034
    %v1036 = vpop.f32.mrb[0].mxu0
    %1037 = vmatprep.mubr.f32.mxu0 0.0
    %1038 = vmatmul.mubr.f32.gmra.mrb[0].mxu0 %v737
    %v1039 = vpop.f32.mrb[0].mxu0
    %v1040 = vadd.f32 0.0, %v1039
    %v1041 = vpop.f32.mrb[0].mxu0
    %1042 = vdwg.mxu0
    %v1043 = vadd.f32 %v923, %v1025
    %v1044 = vadd.f32 %v928, %v1030
    %v1045 = vadd.f32 %v933, %v1035
    %v1046 = vadd.f32 %v938, %v1040
    %v1047 = vadd.f32 %v1043, %v1044
    %v1048 = vadd.f32 %v1047, %v1045
    %v1049 = vadd.f32 %v1048, %v1046
    %v1050 = vrot.slane %v1049, 4
    %v1051 = vadd.f32 %v1049, %v1050
    %v1052 = vrot.slane %v1051, 2
    %v1053 = vadd.f32 %v1051, %v1052
    %v1054 = vrot.slane %v1053, 1
    %v1055 = vadd.f32 %v1053, %v1054
    %v1056 = vmul.f32 %v1043, %v1043
    %v1057 = vmul.f32 %v1044, %v1044
    %v1058 = vmul.f32 %v1045, %v1045
    %v1059 = vmul.f32 %v1046, %v1046
    %v1060 = vadd.f32 %v1056, %v1057
    %v1061 = vadd.f32 %v1060, %v1058
    %v1062 = vadd.f32 %v1061, %v1059
    %v1063 = vrot.slane %v1062, 4
    %v1064 = vadd.f32 %v1062, %v1063
    %v1065 = vrot.slane %v1064, 2
    %v1066 = vadd.f32 %v1064, %v1065
    %v1067 = vrot.slane %v1066, 1
    %v1068 = vadd.f32 %v1066, %v1067
    %1069 = vmatprep.subr.mxu0 0.0
    %1070 = vmatpush1.msra.mxu0 %v89
    %1071 = vmatprep.subr.mxu0 0.0
    %1072 = vmatpush1.msra.mxu0 %v90
    %1073 = vmatprep.subr.mxu0 0.0
    %1074 = vmatpush1.msra.mxu0 %v91
    %1075 = vmatprep.subr.mxu0 0.0
    %1076 = vmatpush1.msra.mxu0 %v92
    %1077 = vmatprep.subr.mxu0 0.0
    %1078 = vmatpush1.msra.mxu0 %v93
    %1079 = vmatprep.subr.mxu0 0.0
    %1080 = vmatpush1.msra.mxu0 %v94
    %1081 = vmatprep.subr.mxu0 0.0
    %1082 = vmatpush1.msra.mxu0 %v95
    %1083 = vmatprep.subr.mxu0 0.0
    %1084 = vmatpush1.msra.mxu0 %v96
    %1085 = vmatprep.subr.mxu0 0.0
    %1086 = vmatpush1.msra.mxu0 %v97
    %1087 = vmatprep.subr.mxu0 0.0
    %1088 = vmatpush1.msra.mxu0 %v98
    %1089 = vmatprep.subr.mxu0 0.0
    %1090 = vmatpush1.msra.mxu0 %v99
    %1091 = vmatprep.subr.mxu0 0.0
    %1092 = vmatpush1.msra.mxu0 %v100
    %1093 = vmatprep.subr.mxu0 0.0
    %1094 = vmatpush1.msra.mxu0 %v101
    %1095 = vmatprep.subr.mxu0 0.0
    %1096 = vmatpush1.msra.mxu0 %v102
    %1097 = vmatprep.subr.mxu0 0.0
    %1098 = vmatpush1.msra.mxu0 %v103
    %1099 = vmatprep.subr.mxu0 0.0
    %1100 = vmatpush1.msra.mxu0 %v104
    %1101 = vmatprep.subr.mxu0 0.0
    %1102 = vmatpush1.msra.mxu0 0.0
    %1103 = vmatprep.subr.mxu0 0.0
    %1104 = vmatpush1.msra.mxu0 0.0
    %1105 = vmatprep.subr.mxu0 0.0
    %1106 = vmatpush1.msra.mxu0 0.0
    %1107 = vmatprep.subr.mxu0 0.0
    %1108 = vmatpush1.msra.mxu0 0.0
    %1109 = vmatprep.subr.mxu0 0.0
    %1110 = vmatpush1.msra.mxu0 0.0
    %1111 = vmatprep.subr.mxu0 0.0
    %1112 = vmatpush1.msra.mxu0 0.0
    %1113 = vmatprep.subr.mxu0 0.0
    %1114 = vmatpush1.msra.mxu0 0.0
    %1115 = vmatprep.subr.mxu0 0.0
    %1116 = vmatpush1.msra.mxu0 0.0
    %1117 = vmatprep.subr.mxu0 0.0
    %1118 = vmatpush1.msra.mxu0 0.0
    %1119 = vmatprep.subr.mxu0 0.0
    %1120 = vmatpush1.msra.mxu0 0.0
    %1121 = vmatprep.subr.mxu0 0.0
    %1122 = vmatpush1.msra.mxu0 0.0
    %1123 = vmatprep.subr.mxu0 0.0
    %1124 = vmatpush1.msra.mxu0 0.0
    %1125 = vmatprep.subr.mxu0 0.0
    %1126 = vmatpush1.msra.mxu0 0.0
    %1127 = vmatprep.subr.mxu0 0.0
    %1128 = vmatpush1.msra.mxu0 0.0
    %1129 = vmatprep.subr.mxu0 0.0
    %1130 = vmatpush1.msra.mxu0 0.0
    %1131 = vmatprep.subr.mxu0 0.0
    %1132 = vmatpush1.msra.mxu0 0.0
    %1133 = vmatprep.mubr.f32.mxu0 0.0
    %1134 = vmatmul.mubr.f32.gmra.mrb[0].mxu0 %v1055
    %v1135 = vpop.f32.mrb[0].mxu0
    %v1136 = vadd.f32 0.0, %v1135
    %v1137 = vpop.f32.mrb[0].mxu0
    %1138 = vdwg.mxu0
    %v1139 = vmul.f32 %v1136, 0.001953125
    %1140 = vmatprep.subr.mxu0 0.0
    %1141 = vmatpush1.msra.mxu0 %v89
    %1142 = vmatprep.subr.mxu0 0.0
    %1143 = vmatpush1.msra.mxu0 %v90
    %1144 = vmatprep.subr.mxu0 0.0
    %1145 = vmatpush1.msra.mxu0 %v91
    %1146 = vmatprep.subr.mxu0 0.0
    %1147 = vmatpush1.msra.mxu0 %v92
    %1148 = vmatprep.subr.mxu0 0.0
    %1149 = vmatpush1.msra.mxu0 %v93
    %1150 = vmatprep.subr.mxu0 0.0
    %1151 = vmatpush1.msra.mxu0 %v94
    %1152 = vmatprep.subr.mxu0 0.0
    %1153 = vmatpush1.msra.mxu0 %v95
    %1154 = vmatprep.subr.mxu0 0.0
    %1155 = vmatpush1.msra.mxu0 %v96
    %1156 = vmatprep.subr.mxu0 0.0
    %1157 = vmatpush1.msra.mxu0 %v97
    %1158 = vmatprep.subr.mxu0 0.0
    %1159 = vmatpush1.msra.mxu0 %v98
    %1160 = vmatprep.subr.mxu0 0.0
    %1161 = vmatpush1.msra.mxu0 %v99
    %1162 = vmatprep.subr.mxu0 0.0
    %1163 = vmatpush1.msra.mxu0 %v100
    %1164 = vmatprep.subr.mxu0 0.0
    %1165 = vmatpush1.msra.mxu0 %v101
    %1166 = vmatprep.subr.mxu0 0.0
    %1167 = vmatpush1.msra.mxu0 %v102
    %1168 = vmatprep.subr.mxu0 0.0
    %1169 = vmatpush1.msra.mxu0 %v103
    %1170 = vmatprep.subr.mxu0 0.0
    %1171 = vmatpush1.msra.mxu0 %v104
    %1172 = vmatprep.subr.mxu0 0.0
    %1173 = vmatpush1.msra.mxu0 0.0
    %1174 = vmatprep.subr.mxu0 0.0
    %1175 = vmatpush1.msra.mxu0 0.0
    %1176 = vmatprep.subr.mxu0 0.0
    %1177 = vmatpush1.msra.mxu0 0.0
    %1178 = vmatprep.subr.mxu0 0.0
    %1179 = vmatpush1.msra.mxu0 0.0
    %1180 = vmatprep.subr.mxu0 0.0
    %1181 = vmatpush1.msra.mxu0 0.0
    %1182 = vmatprep.subr.mxu0 0.0
    %1183 = vmatpush1.msra.mxu0 0.0
    %1184 = vmatprep.subr.mxu0 0.0
    %1185 = vmatpush1.msra.mxu0 0.0
    %1186 = vmatprep.subr.mxu0 0.0
    %1187 = vmatpush1.msra.mxu0 0.0
    %1188 = vmatprep.subr.mxu0 0.0
    %1189 = vmatpush1.msra.mxu0 0.0
    %1190 = vmatprep.subr.mxu0 0.0
    %1191 = vmatpush1.msra.mxu0 0.0
    %1192 = vmatprep.subr.mxu0 0.0
    %1193 = vmatpush1.msra.mxu0 0.0
    %1194 = vmatprep.subr.mxu0 0.0
    %1195 = vmatpush1.msra.mxu0 0.0
    %1196 = vmatprep.subr.mxu0 0.0
    %1197 = vmatpush1.msra.mxu0 0.0
    %1198 = vmatprep.subr.mxu0 0.0
    %1199 = vmatpush1.msra.mxu0 0.0
    %1200 = vmatprep.subr.mxu0 0.0
    %1201 = vmatpush1.msra.mxu0 0.0
    %1202 = vmatprep.subr.mxu0 0.0
    %1203 = vmatpush1.msra.mxu0 0.0
    %1204 = vmatprep.mubr.f32.mxu0 0.0
    %1205 = vmatmul.mubr.f32.gmra.mrb[0].mxu0 %v1068
    %v1206 = vpop.f32.mrb[0].mxu0
    %v1207 = vadd.f32 0.0, %v1206
    %v1208 = vpop.f32.mrb[0].mxu0
    %1209 = vdwg.mxu0
    %v1210 = vmul.f32 %v1207, 0.001953125
    %v1211 = vmul.f32 %v1139, %v1139
    %v1212 = vsub.f32 %v1210, %v1211
    %v1213 = vld [vmem:[%s6] sm:$0x1]
    %v1214 = vadd.f32 %v1212, 1e-05
    %v1215 = vrsqrt.pop %v1214
    %v1216 = vmul.f32 %v1213, %v1215
    %v1217 = vld [vmem:[%s7] sm:$0x1]
    %v1218 = vmul.f32 %v1139, %v1216
    %v1219 = vsub.f32 %v1217, %v1218
    %v1221 = vlaneseq
    %v1222 = vshrl.u32 %v1221, 7
    %v1223 = vsub.s32 0, %v1222
    %v1224 = vrot.slane %v1216, %v1223
    %v1226 = vmul.f32 %v1043, %v1224
    %v1227 = vmul.f32 %v1044, %v1224
    %v1228 = vmul.f32 %v1045, %v1224
    %v1229 = vmul.f32 %v1046, %v1224
    %v1231 = vlaneseq
    %v1232 = vshrl.u32 %v1231, 7
    %v1233 = vsub.s32 0, %v1232
    %v1234 = vrot.slane %v1219, %v1233
    %v1236 = vadd.f32 %v1226, %v1234
    %v1237 = vadd.f32 %v1227, %v1234
    %v1238 = vadd.f32 %v1228, %v1234
    %v1239 = vadd.f32 %v1229, %v1234
    %v1240 = vadd.f32 %v1236, %v85
    %v1241 = vadd.f32 %v1237, %v86
    %v1242 = vadd.f32 %v1238, %v87
    %v1243 = vadd.f32 %v1239, %v88
    %v1244 = vmax.f32 %v1240, 0.0
    %v1245 = vmax.f32 %v1241, 0.0
    %v1246 = vmax.f32 %v1242, 0.0
    %v1247 = vmax.f32 %v1243, 0.0
    %1248 = vst [vmem:[#allocation10] sm:$0xff] %v1244
    %1249 = vst [vmem:[#allocation10 + $0x8] sm:$0xff] %v1245
    %1250 = vst [vmem:[#allocation10 + $0x10] sm:$0xff] %v1246
    %1251 = vst [vmem:[#allocation10 + $0x18] sm:$0xff] %v1247
    // Predicated region
    $region50: #{tpu_custom_call.1} parent=1 // pred_check
      _
    $region51: #{tpu_custom_call.1} parent=1 // pred_check_branch
      %1253 = sbr.rel (0) target = $region53
    $region52: #{tpu_custom_call.1} parent=1 // pred_region
      %s1255 = ssub.s32 512, 512
      %1256 = vsyncadd [#allocation4], %s1255
      %s1257 = sshll.u32 [#allocation10], 4
      %s1258 = int_to_ptr.vmem [resolvable:$true] %s1257
      %1263 = dma.vmem_to_hbm [thread:$0]  %s1258, 512, %s8, [#allocation4], 128, 128, 8
    $region53: #{tpu_custom_call.1} parent=1 // pred_fallthru
      _
    // Predicated region
    $region54: #{tpu_custom_call.1} parent=1 // pred_check
      _
    $region55: #{tpu_custom_call.1} parent=1 // pred_check_branch
      %1265 = sbr.rel (0) target = $region57
    $region56: #{tpu_custom_call.1} parent=1 // pred_region
      %1266 = dma.done [#allocation4], 512
    $region57: #{tpu_custom_call.1} parent=1 // pred_fallthru
      _
    %1267 = vsyncpa [#allocation3], 1
    %1268 = vsyncpa [#allocation6], 1
    %1269 = vsyncpa [#allocation9], 1
    %1270 = vsyncpa [#allocation4], 1

</llo_original>
